<compile_context>
chip_gen: v6e
topology: v6e:2x2x1
jax: 0.10.0
libtpu: 0.0.40
codegen_flags: <defaults>
</compile_context>

<pallas_src>
import functools

import numpy as np

import jax
import jax.numpy as jnp
from jax.experimental import pallas as pl
from jax.experimental.pallas import tpu as pltpu

N_NODES = 8
IN_FEATS = 16
HID_FEATS = 32
OUT_FEATS = 32
NUM_CLASSES = 4

GRAPHS_PER_BLOCK = 8                                  # 2 * 8 graphs * 8 nodes = 128 rows / step
ROWS_PER_BLOCK = GRAPHS_PER_BLOCK * 2 * N_NODES       # 128


# ----------------------------- Pallas kernel -----------------------------

def bigcn_kernel(a_ref, xd_ref, xroot_ref, pool_ref, rsel_ref,
                 w1_ref, b1_ref, w2a_ref, w2b_ref, b2_ref,
                 wfc_h2_ref, wfc_root_ref, fcb_ref, out_ref, *, gb):
    """One block of `gb` graphs, both branches fused via block-diagonal operands.

    Row layout (R = gb*2*N): graph g -> TD rows [g*2N, g*2N+N), BU rows [g*2N+N, g*2N+2N).
    Lane layout: TD rows carry data in the first half of each feature block, BU rows in the
    second half (zeros elsewhere), so a single stacked/block-diag weight applies the right
    per-branch weight to every row.
    """
    f32 = jnp.float32
    cdt = w1_ref.dtype                                     # compute (MXU operand) dtype

    A = a_ref[...]                                         # [R, R] graph+branch block-diag

    # conv1 for all graphs & both branches:  H1 = A_norm @ (X @ W1) + b1
    lin1 = jnp.dot(xd_ref[...], w1_ref[...], preferred_element_type=f32)
    h1 = jnp.dot(A, lin1.astype(cdt), preferred_element_type=f32) + b1_ref[...]   # [R, 2H]

    # conv2 on relu(cat(H1, root_extend)); the concat is realised by two stacked weights
    lin2 = (jnp.dot(jnp.maximum(h1, 0.0).astype(cdt), w2a_ref[...],
                    preferred_element_type=f32)
            + jnp.dot(jnp.maximum(xroot_ref[...], 0.0), w2b_ref[...],
                      preferred_element_type=f32))                                  # [R, 2O]
    h2 = jnp.maximum(jnp.dot(A, lin2.astype(cdt), preferred_element_type=f32)
                     + b2_ref[...], 0.0)                                            # [R, 2O]

    # readout: per-(graph, branch) node-mean of relu(conv2) and root row of conv1 (pre-relu)
    pooled = jnp.dot(pool_ref[...], h2.astype(cdt), preferred_element_type=f32)     # [2gb, 2O]
    roots = jnp.dot(rsel_ref[...], h1.astype(cdt), preferred_element_type=f32)      # [2gb, 2H]

    # fc on cat(BU_mean | BU_root | TD_mean | TD_root) via branch-stacked fc weights
    pc = jnp.dot(pooled.astype(cdt), wfc_h2_ref[...], preferred_element_type=f32)   # [2gb, C]
    rc = jnp.dot(roots.astype(cdt), wfc_root_ref[...], preferred_element_type=f32)  # [2gb, C]
    logits = pc[0:gb] + pc[gb:2 * gb] + rc[0:gb] + rc[gb:2 * gb] + fcb_ref[...]     # [gb, C]

    # log_softmax(dim=1)
    m = jnp.max(logits, axis=1, keepdims=True)
    lse = jnp.log(jnp.sum(jnp.exp(logits - m), axis=1, keepdims=True)) + m
    out_ref[...] = logits - lse


# ----------------------------- wrapper -----------------------------

def eb_bigcn_forward(X_all, A_td_all, A_bu_all, roots, params, *,
                     graphs_per_block=GRAPHS_PER_BLOCK,
                     compute_dtype=jnp.float32):
    """Batched BiGCN forward.  Returns log_softmax logits of shape [num_graphs, NUM_CLASSES]."""
    F_, Hd, O, C, n = IN_FEATS, HID_FEATS, OUT_FEATS, NUM_CLASSES, N_NODES
    gb = graphs_per_block
    rows = gb * 2 * n

    Xs = np.asarray(X_all, np.float32)
    Atd = np.asarray(A_td_all, np.float32)
    Abu = np.asarray(A_bu_all, np.float32)
    rts = np.asarray(roots, np.int32)
    num_graphs = Xs.shape[0]
    nb = -(-num_graphs // gb)                 # ceil-div; padded graphs produce ignored rows

    # ---- host-side per-block packing (block-diag over graph x branch) ----
    A_blk = np.zeros((nb, rows, rows), np.float32)
    Xd_blk = np.zeros((nb, rows, 2 * F_), np.float32)
    Xr_blk = np.zeros((nb, rows, 2 * F_), np.float32)
    Pool_blk = np.zeros((nb, 2 * gb, rows), np.float32)
    Rsel_blk = np.zeros((nb, 2 * gb, rows), np.float32)
    for b in range(num_graphs):
        blk, g = divmod(b, gb)
        td0 = g * 2 * n
        bu0 = td0 + n
        A_blk[blk, td0:td0 + n, td0:td0 + n] = Atd[b]
        A_blk[blk, bu0:bu0 + n, bu0:bu0 + n] = Abu[b]
        Xd_blk[blk, td0:td0 + n, 0:F_] = Xs[b]
        Xd_blk[blk, bu0:bu0 + n, F_:2 * F_] = Xs[b]
        xr = Xs[b, rts[b]]
        Xr_blk[blk, td0:td0 + n, 0:F_] = xr                 # root_extend of x (per branch)
        Xr_blk[blk, bu0:bu0 + n, F_:2 * F_] = xr
        Pool_blk[blk, g, bu0:bu0 + n] = 1.0 / n             # BU node-mean (BU_x comes first)
        Pool_blk[blk, gb + g, td0:td0 + n] = 1.0 / n        # TD node-mean
        Rsel_blk[blk, g, bu0 + rts[b]] = 1.0                # BU root row of conv1 output
        Rsel_blk[blk, gb + g, td0 + rts[b]] = 1.0           # TD root row of conv1 output

    # ---- host-side branch block-diagonal / stacked weights (free) ----
    def npf(a):
        return np.asarray(a, np.float32)

    w1_td, w1_bu = npf(params["w1_td"]), npf(params["w1_bu"])
    w2_td, w2_bu = npf(params["w2_td"]), npf(params["w2_bu"])
    b1_td, b1_bu = npf(params["b1_td"]), npf(params["b1_bu"])
    b2_td, b2_bu = npf(params["b2_td"]), npf(params["b2_bu"])
    fcwt, fcb = npf(params["fcwt"]), npf(params["fcb"])

    def blkdiag(a, b):
        out = np.zeros((a.shape[0] + b.shape[0], a.shape[1] + b.shape[1]), np.float32)
        out[:a.shape[0], :a.shape[1]] = a
        out[a.shape[0]:, a.shape[1]:] = b
        return out

    W1_bd = blkdiag(w1_td, w1_bu)                                        # [2F, 2H]
    W2a_bd = blkdiag(w2_td[:Hd], w2_bu[:Hd])                             # [2H, 2O]
    W2b_bd = blkdiag(w2_td[Hd:Hd + F_], w2_bu[Hd:Hd + F_])               # [2F, 2O]

    pat1 = np.zeros((2 * n, 2 * Hd), np.float32)
    pat1[0:n, 0:Hd] = b1_td
    pat1[n:2 * n, Hd:2 * Hd] = b1_bu
    B1_rows = np.tile(pat1, (gb, 1))                                     # [rows, 2H]
    pat2 = np.zeros((2 * n, 2 * O), np.float32)
    pat2[0:n, 0:O] = b2_td
    pat2[n:2 * n, O:2 * O] = b2_bu
    B2_rows = np.tile(pat2, (gb, 1))                                     # [rows, 2O]

    # fc weight row-blocks rearranged to match the branch lane layout (TD lanes first, BU second)
    Wfc_h2 = np.concatenate([fcwt[O + Hd:2 * O + Hd], fcwt[0:O]], axis=0)            # [2O, C]
    Wfc_root = np.concatenate([fcwt[2 * O + Hd:2 * (O + Hd)], fcwt[O:O + Hd]], axis=0)  # [2H, C]

    cdt = compute_dtype

    def jc(a):                      # MXU operands -> compute dtype (bf16 on v6e/v7x if desired)
        return jnp.asarray(a, cdt)

    args = (
        jc(A_blk.reshape(nb * rows, rows)),
        jc(Xd_blk.reshape(nb * rows, 2 * F_)),
        jc(Xr_blk.reshape(nb * rows, 2 * F_)),
        jc(Pool_blk.reshape(nb * 2 * gb, rows)),
        jc(Rsel_blk.reshape(nb * 2 * gb, rows)),
        jc(W1_bd), jnp.asarray(B1_rows, jnp.float32),
        jc(W2a_bd), jc(W2b_bd), jnp.asarray(B2_rows, jnp.float32),
        jc(Wfc_h2), jc(Wfc_root), jnp.asarray(fcb, jnp.float32),
    )

    def resident(shape):            # VMEM-resident across the whole grid
        return pl.BlockSpec(shape, lambda i: (0, 0))

    in_specs = [
        pl.BlockSpec((rows, rows), lambda i: (i, 0)),        # A (block-diag, per block)
        pl.BlockSpec((rows, 2 * F_), lambda i: (i, 0)),      # X (branch lane block-diag)
        pl.BlockSpec((rows, 2 * F_), lambda i: (i, 0)),      # root_extend of x
        pl.BlockSpec((2 * gb, rows), lambda i: (i, 0)),      # node-mean pooling matrix
        pl.BlockSpec((2 * gb, rows), lambda i: (i, 0)),      # conv1 root-row selection matrix
        resident((2 * F_, 2 * Hd)),                          # W1 block-diag
        resident((rows, 2 * Hd)),                            # conv1 bias per row
        resident((2 * Hd, 2 * O)),                           # W2[:H] block-diag
        resident((2 * F_, 2 * O)),                           # W2[H:] block-diag
        resident((rows, 2 * O)),                             # conv2 bias per row
        resident((2 * O, C)),                                # fc rows for h2-means
        resident((2 * Hd, C)),                               # fc rows for conv1 roots
        resident((1, C)),                                    # fc bias
    ]

    out = pl.pallas_call(
        functools.partial(bigcn_kernel, gb=gb),
        out_shape=jax.ShapeDtypeStruct((nb * gb, C), jnp.float32),
        grid=(nb,),
        in_specs=in_specs,
        out_specs=pl.BlockSpec((gb, C), lambda i: (i, 0)),
        compiler_params=pltpu.CompilerParams(
            dimension_semantics=("parallel",),               # shards blocks across v7x's 2 TCs
            vmem_limit_bytes=32 * 1024 * 1024),
    )(*args)
    return out[:num_graphs]


# ----------------------------- glue / reference (plain JAX + numpy) -----------------------------

def dense_gcn_norm_np(edge_src, edge_dst, num_nodes):
    """Dense D^-1/2 (A + I) D^-1/2 with A[dst, src] = 1 (source -> target flow)."""
    A = np.zeros((num_nodes, num_nodes), np.float32)
    A[np.asarray(edge_dst), np.asarray(edge_src)] = 1.0
    A = A + np.eye(num_nodes, dtype=np.float32)
    deg = A.sum(axis=1)
    dinv = np.where(deg > 0, 1.0 / np.sqrt(deg), 0.0).astype(np.float32)
    return dinv[:, None] * A * dinv[None, :]


def reference_forward(x, a_td, a_bu, root_idx, params):
    """Pure-JAX single-graph reference (explicit concatenations). Returns [NUM_CLASSES]."""
    def branch(A, W1, b1, W2, b2):
        H1 = A @ (x @ W1) + b1
        root_ext = jnp.broadcast_to(x[root_idx][None, :], (N_NODES, IN_FEATS))
        C1 = jax.nn.relu(jnp.concatenate([H1, root_ext], axis=1))
        H2 = jax.nn.relu(A @ (C1 @ W2) + b2)
        root_ext2 = jnp.broadcast_to(H1[root_idx][None, :], (N_NODES, HID_FEATS))
        C2 = jnp.concatenate([H2, root_ext2], axis=1)
        return jnp.mean(C2, axis=0)

    td = branch(a_td, params["w1_td"], params["b1_td"], params["w2_td"], params["b2_td"])
    bu = branch(a_bu, params["w1_bu"], params["b1_bu"], params["w2_bu"], params["b2_bu"])
    cat = jnp.concatenate([bu, td], axis=0)
    out = cat @ params["fcwt"] + params["fcb"][0]
    return jax.nn.log_softmax(out)


if __name__ == "__main__":
    key = jax.random.PRNGKey(0)
    k_param, k_x, k_tree, k_root = jax.random.split(key, 4)
    pk = jax.random.split(k_param, 10)

    # deterministic synthetic parameters (shapes from TDrumorGCN/BUrumorGCN + fc)
    params = {
        "w1_td": 0.1 * jax.random.normal(pk[0], (IN_FEATS, HID_FEATS), jnp.float32),
        "b1_td": 0.1 * jax.random.normal(pk[1], (1, HID_FEATS), jnp.float32),
        "w2_td": 0.1 * jax.random.normal(pk[2], (HID_FEATS + IN_FEATS, OUT_FEATS), jnp.float32),
        "b2_td": 0.1 * jax.random.normal(pk[3], (1, OUT_FEATS), jnp.float32),
        "w1_bu": 0.1 * jax.random.normal(pk[4], (IN_FEATS, HID_FEATS), jnp.float32),
        "b1_bu": 0.1 * jax.random.normal(pk[5], (1, HID_FEATS), jnp.float32),
        "w2_bu": 0.1 * jax.random.normal(pk[6], (HID_FEATS + IN_FEATS, OUT_FEATS), jnp.float32),
        "b2_bu": 0.1 * jax.random.normal(pk[7], (1, OUT_FEATS), jnp.float32),
        # torch Linear weight is [C, 2*(O+H)]; store it pre-transposed for x @ W^T
        "fcwt": 0.1 * jax.random.normal(pk[8], (2 * (OUT_FEATS + HID_FEATS), NUM_CLASSES),
                                        jnp.float32),
        "fcb": 0.1 * jax.random.normal(pk[9], (1, NUM_CLASSES), jnp.float32),
    }

    num_graphs = 64                                         # 8 blocks of 8 graphs
    X_all = jax.random.normal(k_x, (num_graphs, N_NODES, IN_FEATS), jnp.float32)
    roots = jax.random.randint(k_root, (num_graphs,), 0, N_NODES)

    # random propagation trees: parent(i) uniform in [0, i)
    tk = jax.random.split(k_tree, N_NODES - 1)
    parents = np.stack(
        [np.asarray(jax.random.randint(tk[i - 1], (num_graphs,), 0, i))
         for i in range(1, N_NODES)], axis=1)               # [B, N-1]

    A_td_list, A_bu_list = [], []
    children = np.arange(1, N_NODES)
    for b in range(num_graphs):
        src = parents[b]                                    # TD edges: parent -> child
        A_td_list.append(dense_gcn_norm_np(src, children, N_NODES))
        A_bu_list.append(dense_gcn_norm_np(children, src, N_NODES))   # BU: reversed
    A_td_all = np.stack(A_td_list)
    A_bu_all = np.stack(A_bu_list)

    # --- Pallas kernel, f32 operands ---
    out = eb_bigcn_forward(X_all, A_td_all, A_bu_all, roots, params)
    out = jax.block_until_ready(out)
    assert out.shape == (num_graphs, NUM_CLASSES)

    # --- pure-JAX reference ---
    ref = jax.vmap(lambda x, atd, abu, r: reference_forward(x, atd, abu, r, params))(
        X_all, jnp.asarray(A_td_all), jnp.asarray(A_bu_all), roots)
    assert jnp.allclose(out, ref, atol=1e-4, rtol=1e-4), float(jnp.max(jnp.abs(out - ref)))

    # --- bf16 MXU operands (native dtype on v6e/v7x), f32 accumulation ---
    out_bf16 = eb_bigcn_forward(X_all, A_td_all, A_bu_all, roots, params,
                                compute_dtype=jnp.bfloat16)
    out_bf16 = jax.block_until_ready(out_bf16)
    assert float(jnp.max(jnp.abs(out_bf16 - ref))) < 1e-1

    print("KERNEL_OK")
</pallas_src>

<mosaic_0001>
module attributes {stable_mosaic.version = 11 : i64} {
  func.func @bigcn_kernel(%arg0: i32, %arg1: memref<128x128xf32, #tpu.memory_space<vmem>>, %arg2: memref<128x32xf32, #tpu.memory_space<vmem>>, %arg3: memref<128x32xf32, #tpu.memory_space<vmem>>, %arg4: memref<16x128xf32, #tpu.memory_space<vmem>>, %arg5: memref<16x128xf32, #tpu.memory_space<vmem>>, %arg6: memref<32x64xf32, #tpu.memory_space<vmem>>, %arg7: memref<128x64xf32, #tpu.memory_space<vmem>>, %arg8: memref<64x64xf32, #tpu.memory_space<vmem>>, %arg9: memref<32x64xf32, #tpu.memory_space<vmem>>, %arg10: memref<128x64xf32, #tpu.memory_space<vmem>>, %arg11: memref<64x4xf32, #tpu.memory_space<vmem>>, %arg12: memref<64x4xf32, #tpu.memory_space<vmem>>, %arg13: memref<1x4xf32, #tpu.memory_space<vmem>>, %arg14: memref<8x4xf32, #tpu.memory_space<vmem>>) attributes {dimension_semantics = [#tpu.dimension_semantics<parallel>], iteration_bounds = array<i64: 8>, scalar_prefetch = 0 : i64, scratch_operands = 0 : i64, tpu.core_type = #tpu.core_type<tc>, window_params = [{transform_indices = @transform_0, window_bounds = array<i64: 128, 128>}, {transform_indices = @transform_1, window_bounds = array<i64: 128, 32>}, {transform_indices = @transform_2, window_bounds = array<i64: 128, 32>}, {transform_indices = @transform_3, window_bounds = array<i64: 16, 128>}, {transform_indices = @transform_4, window_bounds = array<i64: 16, 128>}, {pipeline_mode = #tpu.pipeline_mode<synchronous>, transform_indices = @transform_5, window_bounds = array<i64: 32, 64>}, {pipeline_mode = #tpu.pipeline_mode<synchronous>, transform_indices = @transform_6, window_bounds = array<i64: 128, 64>}, {pipeline_mode = #tpu.pipeline_mode<synchronous>, transform_indices = @transform_7, window_bounds = array<i64: 64, 64>}, {pipeline_mode = #tpu.pipeline_mode<synchronous>, transform_indices = @transform_8, window_bounds = array<i64: 32, 64>}, {pipeline_mode = #tpu.pipeline_mode<synchronous>, transform_indices = @transform_9, window_bounds = array<i64: 128, 64>}, {pipeline_mode = #tpu.pipeline_mode<synchronous>, transform_indices = @transform_10, window_bounds = array<i64: 64, 4>}, {pipeline_mode = #tpu.pipeline_mode<synchronous>, transform_indices = @transform_11, window_bounds = array<i64: 64, 4>}, {pipeline_mode = #tpu.pipeline_mode<synchronous>, transform_indices = @transform_12, window_bounds = array<i64: 1, 4>}, {transform_indices = @transform_13, window_bounds = array<i64: 8, 4>}]} {
    %c0 = arith.constant 0 : index
    %c0_0 = arith.constant 0 : index
    %0 = vector.load %arg1[%c0, %c0_0] : memref<128x128xf32, #tpu.memory_space<vmem>>, vector<128x128xf32>
    %c0_1 = arith.constant 0 : index
    %c0_2 = arith.constant 0 : index
    %1 = vector.load %arg2[%c0_1, %c0_2] : memref<128x32xf32, #tpu.memory_space<vmem>>, vector<128x32xf32>
    %c0_3 = arith.constant 0 : index
    %c0_4 = arith.constant 0 : index
    %2 = vector.load %arg6[%c0_3, %c0_4] : memref<32x64xf32, #tpu.memory_space<vmem>>, vector<32x64xf32>
    %cst = arith.constant dense<0.000000e+00> : vector<128x64xf32>
    %3 = tpu.matmul %1, %2, %cst {dimension_numbers = #tpu.dot_dimension_numbers<[1], [0], [0], [1], [0, 0, 1, 1], [], []>} : vector<128x32xf32>, vector<32x64xf32>, vector<128x64xf32> -> vector<128x64xf32>
    %cst_5 = arith.constant dense<0.000000e+00> : vector<128x64xf32>
    %4 = tpu.matmul %0, %3, %cst_5 {dimension_numbers = #tpu.dot_dimension_numbers<[1], [0], [0], [1], [0, 0, 1, 1], [], []>} : vector<128x128xf32>, vector<128x64xf32>, vector<128x64xf32> -> vector<128x64xf32>
    %c0_6 = arith.constant 0 : index
    %c0_7 = arith.constant 0 : index
    %5 = vector.load %arg7[%c0_6, %c0_7] : memref<128x64xf32, #tpu.memory_space<vmem>>, vector<128x64xf32>
    %6 = arith.addf %4, %5 : vector<128x64xf32>
    %cst_8 = arith.constant 0.000000e+00 : f32
    %7 = vector.broadcast %cst_8 : f32 to vector<128x64xf32>
    %8 = arith.maximumf %6, %7 : vector<128x64xf32>
    %c0_9 = arith.constant 0 : index
    %c0_10 = arith.constant 0 : index
    %9 = vector.load %arg8[%c0_9, %c0_10] : memref<64x64xf32, #tpu.memory_space<vmem>>, vector<64x64xf32>
    %cst_11 = arith.constant dense<0.000000e+00> : vector<128x64xf32>
    %10 = tpu.matmul %8, %9, %cst_11 {dimension_numbers = #tpu.dot_dimension_numbers<[1], [0], [0], [1], [0, 0, 1, 1], [], []>} : vector<128x64xf32>, vector<64x64xf32>, vector<128x64xf32> -> vector<128x64xf32>
    %c0_12 = arith.constant 0 : index
    %c0_13 = arith.constant 0 : index
    %11 = vector.load %arg3[%c0_12, %c0_13] : memref<128x32xf32, #tpu.memory_space<vmem>>, vector<128x32xf32>
    %cst_14 = arith.constant 0.000000e+00 : f32
    %12 = vector.broadcast %cst_14 : f32 to vector<128x32xf32>
    %13 = arith.maximumf %11, %12 : vector<128x32xf32>
    %c0_15 = arith.constant 0 : index
    %c0_16 = arith.constant 0 : index
    %14 = vector.load %arg9[%c0_15, %c0_16] : memref<32x64xf32, #tpu.memory_space<vmem>>, vector<32x64xf32>
    %cst_17 = arith.constant dense<0.000000e+00> : vector<128x64xf32>
    %15 = tpu.matmul %13, %14, %cst_17 {dimension_numbers = #tpu.dot_dimension_numbers<[1], [0], [0], [1], [0, 0, 1, 1], [], []>} : vector<128x32xf32>, vector<32x64xf32>, vector<128x64xf32> -> vector<128x64xf32>
    %16 = arith.addf %10, %15 : vector<128x64xf32>
    %cst_18 = arith.constant dense<0.000000e+00> : vector<128x64xf32>
    %17 = tpu.matmul %0, %16, %cst_18 {dimension_numbers = #tpu.dot_dimension_numbers<[1], [0], [0], [1], [0, 0, 1, 1], [], []>} : vector<128x128xf32>, vector<128x64xf32>, vector<128x64xf32> -> vector<128x64xf32>
    %c0_19 = arith.constant 0 : index
    %c0_20 = arith.constant 0 : index
    %18 = vector.load %arg10[%c0_19, %c0_20] : memref<128x64xf32, #tpu.memory_space<vmem>>, vector<128x64xf32>
    %19 = arith.addf %17, %18 : vector<128x64xf32>
    %cst_21 = arith.constant 0.000000e+00 : f32
    %20 = vector.broadcast %cst_21 : f32 to vector<128x64xf32>
    %21 = arith.maximumf %19, %20 : vector<128x64xf32>
    %c0_22 = arith.constant 0 : index
    %c0_23 = arith.constant 0 : index
    %22 = vector.load %arg4[%c0_22, %c0_23] : memref<16x128xf32, #tpu.memory_space<vmem>>, vector<16x128xf32>
    %cst_24 = arith.constant dense<0.000000e+00> : vector<16x64xf32>
    %23 = tpu.matmul %22, %21, %cst_24 {dimension_numbers = #tpu.dot_dimension_numbers<[1], [0], [0], [1], [0, 0, 1, 1], [], []>} : vector<16x128xf32>, vector<128x64xf32>, vector<16x64xf32> -> vector<16x64xf32>
    %c0_25 = arith.constant 0 : index
    %c0_26 = arith.constant 0 : index
    %24 = vector.load %arg5[%c0_25, %c0_26] : memref<16x128xf32, #tpu.memory_space<vmem>>, vector<16x128xf32>
    %cst_27 = arith.constant dense<0.000000e+00> : vector<16x64xf32>
    %25 = tpu.matmul %24, %6, %cst_27 {dimension_numbers = #tpu.dot_dimension_numbers<[1], [0], [0], [1], [0, 0, 1, 1], [], []>} : vector<16x128xf32>, vector<128x64xf32>, vector<16x64xf32> -> vector<16x64xf32>
    %c0_28 = arith.constant 0 : index
    %c0_29 = arith.constant 0 : index
    %26 = vector.load %arg11[%c0_28, %c0_29] : memref<64x4xf32, #tpu.memory_space<vmem>>, vector<64x4xf32>
    %cst_30 = arith.constant dense<0.000000e+00> : vector<16x4xf32>
    %27 = tpu.matmul %23, %26, %cst_30 {dimension_numbers = #tpu.dot_dimension_numbers<[1], [0], [0], [1], [0, 0, 1, 1], [], []>} : vector<16x64xf32>, vector<64x4xf32>, vector<16x4xf32> -> vector<16x4xf32>
    %c0_31 = arith.constant 0 : index
    %c0_32 = arith.constant 0 : index
    %28 = vector.load %arg12[%c0_31, %c0_32] : memref<64x4xf32, #tpu.memory_space<vmem>>, vector<64x4xf32>
    %cst_33 = arith.constant dense<0.000000e+00> : vector<16x4xf32>
    %29 = tpu.matmul %25, %28, %cst_33 {dimension_numbers = #tpu.dot_dimension_numbers<[1], [0], [0], [1], [0, 0, 1, 1], [], []>} : vector<16x64xf32>, vector<64x4xf32>, vector<16x4xf32> -> vector<16x4xf32>
    %30 = vector.extract_strided_slice %27 {offsets = [0, 0], sizes = [8, 4], strides = [1, 1]} : vector<16x4xf32> to vector<8x4xf32>
    %31 = vector.extract_strided_slice %27 {offsets = [8, 0], sizes = [8, 4], strides = [1, 1]} : vector<16x4xf32> to vector<8x4xf32>
    %32 = arith.addf %30, %31 : vector<8x4xf32>
    %33 = vector.extract_strided_slice %29 {offsets = [0, 0], sizes = [8, 4], strides = [1, 1]} : vector<16x4xf32> to vector<8x4xf32>
    %34 = arith.addf %32, %33 : vector<8x4xf32>
    %35 = vector.extract_strided_slice %29 {offsets = [8, 0], sizes = [8, 4], strides = [1, 1]} : vector<16x4xf32> to vector<8x4xf32>
    %36 = arith.addf %34, %35 : vector<8x4xf32>
    %c0_34 = arith.constant 0 : index
    %c0_35 = arith.constant 0 : index
    %37 = vector.load %arg13[%c0_34, %c0_35] : memref<1x4xf32, #tpu.memory_space<vmem>>, vector<1x4xf32>
    %38 = vector.broadcast %37 : vector<1x4xf32> to vector<8x4xf32>
    %39 = arith.addf %36, %38 : vector<8x4xf32>
    %cst_36 = arith.constant dense<0xFF800000> : vector<8xf32>
    %40 = vector.multi_reduction <maximumf>, %39, %cst_36 [1] : vector<8x4xf32> to vector<8xf32>
    %41 = vector.shape_cast %40 : vector<8xf32> to vector<8x1xf32>
    %42 = vector.broadcast %41 : vector<8x1xf32> to vector<8x4xf32>
    %43 = arith.subf %39, %42 : vector<8x4xf32>
    %44 = math.exp %43 : vector<8x4xf32>
    %cst_37 = arith.constant dense<0.000000e+00> : vector<8xf32>
    %45 = vector.multi_reduction <add>, %44, %cst_37 [1] : vector<8x4xf32> to vector<8xf32>
    %46 = vector.shape_cast %45 : vector<8xf32> to vector<8x1xf32>
    %47 = math.log %46 : vector<8x1xf32>
    %48 = arith.addf %47, %41 : vector<8x1xf32>
    %49 = vector.broadcast %48 : vector<8x1xf32> to vector<8x4xf32>
    %50 = arith.subf %39, %49 : vector<8x4xf32>
    %c0_38 = arith.constant 0 : index
    %c0_39 = arith.constant 0 : index
    %51 = vector.load %arg14[%c0_38, %c0_39] : memref<8x4xf32, #tpu.memory_space<vmem>>, vector<8x4xf32>
    tpu.vector_store %arg14[%c0_38, %c0_39], %50 {strides = array<i32>} : memref<8x4xf32, #tpu.memory_space<vmem>>, vector<8x4xf32>,
    return
  }
  func.func @transform_0(%arg0: i32) -> (i32, i32) {
    %c0_i32 = arith.constant 0 : i32
    %c0_i32_0 = arith.constant 0 : i32
    return %arg0, %c0_i32 : i32, i32
  }
  func.func @transform_1(%arg0: i32) -> (i32, i32) {
    %c0_i32 = arith.constant 0 : i32
    %c0_i32_0 = arith.constant 0 : i32
    return %arg0, %c0_i32 : i32, i32
  }
  func.func @transform_2(%arg0: i32) -> (i32, i32) {
    %c0_i32 = arith.constant 0 : i32
    %c0_i32_0 = arith.constant 0 : i32
    return %arg0, %c0_i32 : i32, i32
  }
  func.func @transform_3(%arg0: i32) -> (i32, i32) {
    %c0_i32 = arith.constant 0 : i32
    %c0_i32_0 = arith.constant 0 : i32
    return %arg0, %c0_i32 : i32, i32
  }
  func.func @transform_4(%arg0: i32) -> (i32, i32) {
    %c0_i32 = arith.constant 0 : i32
    %c0_i32_0 = arith.constant 0 : i32
    return %arg0, %c0_i32 : i32, i32
  }
  func.func @transform_5(%arg0: i32) -> (i32, i32) {
    %c0_i32 = arith.constant 0 : i32
    %c0_i32_0 = arith.constant 0 : i32
    %c0_i32_1 = arith.constant 0 : i32
    return %c0_i32, %c0_i32_0 : i32, i32
  }
  func.func @transform_6(%arg0: i32) -> (i32, i32) {
    %c0_i32 = arith.constant 0 : i32
    %c0_i32_0 = arith.constant 0 : i32
    %c0_i32_1 = arith.constant 0 : i32
    return %c0_i32, %c0_i32_0 : i32, i32
  }
  func.func @transform_7(%arg0: i32) -> (i32, i32) {
    %c0_i32 = arith.constant 0 : i32
    %c0_i32_0 = arith.constant 0 : i32
    %c0_i32_1 = arith.constant 0 : i32
    return %c0_i32, %c0_i32_0 : i32, i32
  }
  func.func @transform_8(%arg0: i32) -> (i32, i32) {
    %c0_i32 = arith.constant 0 : i32
    %c0_i32_0 = arith.constant 0 : i32
    %c0_i32_1 = arith.constant 0 : i32
    return %c0_i32, %c0_i32_0 : i32, i32
  }
  func.func @transform_9(%arg0: i32) -> (i32, i32) {
    %c0_i32 = arith.constant 0 : i32
    %c0_i32_0 = arith.constant 0 : i32
    %c0_i32_1 = arith.constant 0 : i32
    return %c0_i32, %c0_i32_0 : i32, i32
  }
  func.func @transform_10(%arg0: i32) -> (i32, i32) {
    %c0_i32 = arith.constant 0 : i32
    %c0_i32_0 = arith.constant 0 : i32
    %c0_i32_1 = arith.constant 0 : i32
    return %c0_i32, %c0_i32_0 : i32, i32
  }
  func.func @transform_11(%arg0: i32) -> (i32, i32) {
    %c0_i32 = arith.constant 0 : i32
    %c0_i32_0 = arith.constant 0 : i32
    %c0_i32_1 = arith.constant 0 : i32
    return %c0_i32, %c0_i32_0 : i32, i32
  }
  func.func @transform_12(%arg0: i32) -> (i32, i32) {
    %c0_i32 = arith.constant 0 : i32
    %c0_i32_0 = arith.constant 0 : i32
    %c0_i32_1 = arith.constant 0 : i32
    return %c0_i32, %c0_i32_0 : i32, i32
  }
  func.func @transform_13(%arg0: i32) -> (i32, i32) {
    %c0_i32 = arith.constant 0 : i32
    %c0_i32_0 = arith.constant 0 : i32
    return %arg0, %c0_i32 : i32, i32
  }
}

</mosaic_0001>

<llo_original>
// kernel: tpu_custom_call.1
$region0: #{tpu_custom_call.1}
  #allocation0 [shape = 'u32[]', space=smem, size = 0x4, offset = 0x4, fixed_abs, tag = 'smem constant byte address 0x4 - core index']
  #allocation1 [shape = 'u32[144,128]{1,0:T(1,128)}', space=vmem, size = 0x12000, scoped, tag = 'internal scratch']
  %s0 = inlined_call_operand.vmem [shape: f32[1024,128], index: 0, kind: input, shape index: {}]
  %s1 = inlined_call_operand.vmem [shape: f32[1024,32], index: 1, kind: input, shape index: {}]
  %s2 = inlined_call_operand.vmem [shape: f32[1024,32], index: 2, kind: input, shape index: {}]
  %s3 = inlined_call_operand.vmem [shape: f32[128,128], index: 3, kind: input, shape index: {}]
  %s4 = inlined_call_operand.vmem [shape: f32[128,128], index: 4, kind: input, shape index: {}]
  %s5 = inlined_call_operand.vmem [shape: f32[32,64], index: 5, kind: input, shape index: {}]
  %s6 = inlined_call_operand.vmem [shape: f32[128,64], index: 6, kind: input, shape index: {}]
  %s7 = inlined_call_operand.vmem [shape: f32[64,64], index: 7, kind: input, shape index: {}]
  %s8 = inlined_call_operand.vmem [shape: f32[32,64], index: 8, kind: input, shape index: {}]
  %s9 = inlined_call_operand.vmem [shape: f32[128,64], index: 9, kind: input, shape index: {}]
  %s10 = inlined_call_operand.vmem [shape: f32[64,4], index: 10, kind: input, shape index: {}]
  %s11 = inlined_call_operand.vmem [shape: f32[64,4], index: 11, kind: input, shape index: {}]
  %s12 = inlined_call_operand.vmem [shape: f32[1,4], index: 12, kind: input, shape index: {}]
  %s13 = inlined_call_operand.vmem [shape: f32[64,4], index: 13, kind: output, shape index: {}]
  %s14 = sld [smem:[#allocation0]]
  $region85: #{tpu_custom_call.1} parent=0
    _
  %s16 = ssub.s32 1, %s14
  %s17 = scalar_select 0, %s16, %s14
  loop: start=0, step=1, limit=10
  $region2: #{tpu_custom_call.1} parent=0 // loop_pre_header
    _
  $region3: #{tpu_custom_call.1} parent=0 // loop_header
    %s19 = sphi 0, %s23
    %p20 = scmp.ge.s32.totalorder %s19, 10
    %s29 = sphi 0, %s31
    %s32 = sphi 0, %s29
    %s33 = sphi 0, %s32
    %s49 = sphi 0, %s33
    %s55 = sphi 0, %s57
    %s58 = sphi 0, %s55
    %s59 = sphi 0, %s58
    %s75 = sphi 0, %s59
    %s81 = sphi 0, %s83
    %s84 = sphi 0, %s81
    %s85 = sphi 0, %s84
    %s101 = sphi 0, %s85
    %s107 = sphi 0, %s109
    %s110 = sphi 0, %s107
    %s111 = sphi 0, %s110
    %s127 = sphi 0, %s111
    %s133 = sphi 0, %s135
    %s136 = sphi 0, %s133
    %s137 = sphi 0, %s136
    %s153 = sphi 0, %s137
    %s157 = sphi 0, %s157
    %s159 = sphi 0, %s157
    %s160 = sphi 0, %s159
    %s174 = sphi 0, %s160
    %s178 = sphi 0, %s178
    %s180 = sphi 0, %s178
    %s181 = sphi 0, %s180
    %s195 = sphi 0, %s181
    %s199 = sphi 0, %s199
    %s201 = sphi 0, %s199
    %s202 = sphi 0, %s201
    %s216 = sphi 0, %s202
    %s220 = sphi 0, %s220
    %s222 = sphi 0, %s220
    %s223 = sphi 0, %s222
    %s237 = sphi 0, %s223
    %s241 = sphi 0, %s241
    %s243 = sphi 0, %s241
    %s244 = sphi 0, %s243
    %s258 = sphi 0, %s244
    %s262 = sphi 0, %s262
    %s264 = sphi 0, %s262
    %s265 = sphi 0, %s264
    %s279 = sphi 0, %s265
    %s283 = sphi 0, %s283
    %s285 = sphi 0, %s283
    %s286 = sphi 0, %s285
    %s300 = sphi 0, %s286
    %s304 = sphi 0, %s304
    %s306 = sphi 0, %s304
    %s307 = sphi 0, %s306
    %s321 = sphi 0, %s307
    %s327 = sphi 0, %s329
    %s330 = sphi 0, %s327
    %s331 = sphi 0, %s330
    %s347 = sphi 0, %s331
  $region4: #{tpu_custom_call.1} parent=0 // loop_header_branch
    %22 = sbr.rel (%p20) target = $region8
  $region5: #{tpu_custom_call.1} parent=0 // loop_body
    %s24 = ssub.s32 %s19, 1
    %s25 = ssub.s32 %s19, 2
    %s26 = sadd.s32 %s19, 1
    %s27 = ssub.s32 %s19, %s26
    %p28 = scmp.eq.s32.totalorder %s27, 0
    %s30 = sadd.s32 %s29, 1
    %s31 = scalar_select %p28, %s29, %s30
    %p34 = pneg %p28
    %p35 = scmp.eq.s32.totalorder %s19, 7
    %p36 = por %p34, %p35
    %p37 = scmp.ne.s32.totalorder %s29, %s32
    %p38 = scmp.eq.s32.totalorder %s19, 0
    %p39 = por %p37, %p38
    %p40 = scmp.ne.s32.totalorder %s29, %s32
    %p41 = scmp.eq.s32.totalorder %s24, 7
    %p42 = por %p40, %p41
    %p43 = scmp.ne.s32.totalorder %s32, %s33
    %p44 = scmp.eq.s32.totalorder %s24, 0
    %p45 = por %p43, %p44
    %p46 = scmp.ne.s32.totalorder %s32, %s33
    %p47 = scmp.eq.s32.totalorder %s25, 7
    %p48 = por %p46, %p47
    %p50 = scmp.ne.s32.totalorder %s33, %s49
    %p51 = scmp.eq.s32.totalorder %s25, 0
    %p52 = por %p50, %p51
    %s53 = ssub.s32 %s19, %s26
    %p54 = scmp.eq.s32.totalorder %s53, 0
    %s56 = sadd.s32 %s55, 1
    %s57 = scalar_select %p54, %s55, %s56
    %p60 = pneg %p54
    %p61 = scmp.eq.s32.totalorder %s19, 7
    %p62 = por %p60, %p61
    %p63 = scmp.ne.s32.totalorder %s55, %s58
    %p64 = scmp.eq.s32.totalorder %s19, 0
    %p65 = por %p63, %p64
    %p66 = scmp.ne.s32.totalorder %s55, %s58
    %p67 = scmp.eq.s32.totalorder %s24, 7
    %p68 = por %p66, %p67
    %p69 = scmp.ne.s32.totalorder %s58, %s59
    %p70 = scmp.eq.s32.totalorder %s24, 0
    %p71 = por %p69, %p70
    %p72 = scmp.ne.s32.totalorder %s58, %s59
    %p73 = scmp.eq.s32.totalorder %s25, 7
    %p74 = por %p72, %p73
    %p76 = scmp.ne.s32.totalorder %s59, %s75
    %p77 = scmp.eq.s32.totalorder %s25, 0
    %p78 = por %p76, %p77
    %s79 = ssub.s32 %s19, %s26
    %p80 = scmp.eq.s32.totalorder %s79, 0
    %s82 = sadd.s32 %s81, 1
    %s83 = scalar_select %p80, %s81, %s82
    %p86 = pneg %p80
    %p87 = scmp.eq.s32.totalorder %s19, 7
    %p88 = por %p86, %p87
    %p89 = scmp.ne.s32.totalorder %s81, %s84
    %p90 = scmp.eq.s32.totalorder %s19, 0
    %p91 = por %p89, %p90
    %p92 = scmp.ne.s32.totalorder %s81, %s84
    %p93 = scmp.eq.s32.totalorder %s24, 7
    %p94 = por %p92, %p93
    %p95 = scmp.ne.s32.totalorder %s84, %s85
    %p96 = scmp.eq.s32.totalorder %s24, 0
    %p97 = por %p95, %p96
    %p98 = scmp.ne.s32.totalorder %s84, %s85
    %p99 = scmp.eq.s32.totalorder %s25, 7
    %p100 = por %p98, %p99
    %p102 = scmp.ne.s32.totalorder %s85, %s101
    %p103 = scmp.eq.s32.totalorder %s25, 0
    %p104 = por %p102, %p103
    %s105 = ssub.s32 %s19, %s26
    %p106 = scmp.eq.s32.totalorder %s105, 0
    %s108 = sadd.s32 %s107, 1
    %s109 = scalar_select %p106, %s107, %s108
    %p112 = pneg %p106
    %p113 = scmp.eq.s32.totalorder %s19, 7
    %p114 = por %p112, %p113
    %p115 = scmp.ne.s32.totalorder %s107, %s110
    %p116 = scmp.eq.s32.totalorder %s19, 0
    %p117 = por %p115, %p116
    %p118 = scmp.ne.s32.totalorder %s107, %s110
    %p119 = scmp.eq.s32.totalorder %s24, 7
    %p120 = por %p118, %p119
    %p121 = scmp.ne.s32.totalorder %s110, %s111
    %p122 = scmp.eq.s32.totalorder %s24, 0
    %p123 = por %p121, %p122
    %p124 = scmp.ne.s32.totalorder %s110, %s111
    %p125 = scmp.eq.s32.totalorder %s25, 7
    %p126 = por %p124, %p125
    %p128 = scmp.ne.s32.totalorder %s111, %s127
    %p129 = scmp.eq.s32.totalorder %s25, 0
    %p130 = por %p128, %p129
    %s131 = ssub.s32 %s19, %s26
    %p132 = scmp.eq.s32.totalorder %s131, 0
    %s134 = sadd.s32 %s133, 1
    %s135 = scalar_select %p132, %s133, %s134
    %p138 = pneg %p132
    %p139 = scmp.eq.s32.totalorder %s19, 7
    %p140 = por %p138, %p139
    %p141 = scmp.ne.s32.totalorder %s133, %s136
    %p142 = scmp.eq.s32.totalorder %s19, 0
    %p143 = por %p141, %p142
    %p144 = scmp.ne.s32.totalorder %s133, %s136
    %p145 = scmp.eq.s32.totalorder %s24, 7
    %p146 = por %p144, %p145
    %p147 = scmp.ne.s32.totalorder %s136, %s137
    %p148 = scmp.eq.s32.totalorder %s24, 0
    %p149 = por %p147, %p148
    %p150 = scmp.ne.s32.totalorder %s136, %s137
    %p151 = scmp.eq.s32.totalorder %s25, 7
    %p152 = por %p150, %p151
    %p154 = scmp.ne.s32.totalorder %s137, %s153
    %p155 = scmp.eq.s32.totalorder %s25, 0
    %p156 = por %p154, %p155
    %s158 = sadd.s32 %s157, 1
    %p161 = scmp.eq.s32.totalorder %s19, 7
    %p162 = scmp.ne.s32.totalorder %s157, %s159
    %p163 = scmp.eq.s32.totalorder %s19, 0
    %p164 = por %p162, %p163
    %p165 = scmp.ne.s32.totalorder %s157, %s159
    %p166 = scmp.eq.s32.totalorder %s24, 7
    %p167 = por %p165, %p166
    %p168 = scmp.ne.s32.totalorder %s159, %s160
    %p169 = scmp.eq.s32.totalorder %s24, 0
    %p170 = por %p168, %p169
    %p171 = scmp.ne.s32.totalorder %s159, %s160
    %p172 = scmp.eq.s32.totalorder %s25, 7
    %p173 = por %p171, %p172
    %p175 = scmp.ne.s32.totalorder %s160, %s174
    %p176 = scmp.eq.s32.totalorder %s25, 0
    %p177 = por %p175, %p176
    %s179 = sadd.s32 %s178, 1
    %p182 = scmp.eq.s32.totalorder %s19, 7
    %p183 = scmp.ne.s32.totalorder %s178, %s180
    %p184 = scmp.eq.s32.totalorder %s19, 0
    %p185 = por %p183, %p184
    %p186 = scmp.ne.s32.totalorder %s178, %s180
    %p187 = scmp.eq.s32.totalorder %s24, 7
    %p188 = por %p186, %p187
    %p189 = scmp.ne.s32.totalorder %s180, %s181
    %p190 = scmp.eq.s32.totalorder %s24, 0
    %p191 = por %p189, %p190
    %p192 = scmp.ne.s32.totalorder %s180, %s181
    %p193 = scmp.eq.s32.totalorder %s25, 7
    %p194 = por %p192, %p193
    %p196 = scmp.ne.s32.totalorder %s181, %s195
    %p197 = scmp.eq.s32.totalorder %s25, 0
    %p198 = por %p196, %p197
    %s200 = sadd.s32 %s199, 1
    %p203 = scmp.eq.s32.totalorder %s19, 7
    %p204 = scmp.ne.s32.totalorder %s199, %s201
    %p205 = scmp.eq.s32.totalorder %s19, 0
    %p206 = por %p204, %p205
    %p207 = scmp.ne.s32.totalorder %s199, %s201
    %p208 = scmp.eq.s32.totalorder %s24, 7
    %p209 = por %p207, %p208
    %p210 = scmp.ne.s32.totalorder %s201, %s202
    %p211 = scmp.eq.s32.totalorder %s24, 0
    %p212 = por %p210, %p211
    %p213 = scmp.ne.s32.totalorder %s201, %s202
    %p214 = scmp.eq.s32.totalorder %s25, 7
    %p215 = por %p213, %p214
    %p217 = scmp.ne.s32.totalorder %s202, %s216
    %p218 = scmp.eq.s32.totalorder %s25, 0
    %p219 = por %p217, %p218
    %s221 = sadd.s32 %s220, 1
    %p224 = scmp.eq.s32.totalorder %s19, 7
    %p225 = scmp.ne.s32.totalorder %s220, %s222
    %p226 = scmp.eq.s32.totalorder %s19, 0
    %p227 = por %p225, %p226
    %p228 = scmp.ne.s32.totalorder %s220, %s222
    %p229 = scmp.eq.s32.totalorder %s24, 7
    %p230 = por %p228, %p229
    %p231 = scmp.ne.s32.totalorder %s222, %s223
    %p232 = scmp.eq.s32.totalorder %s24, 0
    %p233 = por %p231, %p232
    %p234 = scmp.ne.s32.totalorder %s222, %s223
    %p235 = scmp.eq.s32.totalorder %s25, 7
    %p236 = por %p234, %p235
    %p238 = scmp.ne.s32.totalorder %s223, %s237
    %p239 = scmp.eq.s32.totalorder %s25, 0
    %p240 = por %p238, %p239
    %s242 = sadd.s32 %s241, 1
    %p245 = scmp.eq.s32.totalorder %s19, 7
    %p246 = scmp.ne.s32.totalorder %s241, %s243
    %p247 = scmp.eq.s32.totalorder %s19, 0
    %p248 = por %p246, %p247
    %p249 = scmp.ne.s32.totalorder %s241, %s243
    %p250 = scmp.eq.s32.totalorder %s24, 7
    %p251 = por %p249, %p250
    %p252 = scmp.ne.s32.totalorder %s243, %s244
    %p253 = scmp.eq.s32.totalorder %s24, 0
    %p254 = por %p252, %p253
    %p255 = scmp.ne.s32.totalorder %s243, %s244
    %p256 = scmp.eq.s32.totalorder %s25, 7
    %p257 = por %p255, %p256
    %p259 = scmp.ne.s32.totalorder %s244, %s258
    %p260 = scmp.eq.s32.totalorder %s25, 0
    %p261 = por %p259, %p260
    %s263 = sadd.s32 %s262, 1
    %p266 = scmp.eq.s32.totalorder %s19, 7
    %p267 = scmp.ne.s32.totalorder %s262, %s264
    %p268 = scmp.eq.s32.totalorder %s19, 0
    %p269 = por %p267, %p268
    %p270 = scmp.ne.s32.totalorder %s262, %s264
    %p271 = scmp.eq.s32.totalorder %s24, 7
    %p272 = por %p270, %p271
    %p273 = scmp.ne.s32.totalorder %s264, %s265
    %p274 = scmp.eq.s32.totalorder %s24, 0
    %p275 = por %p273, %p274
    %p276 = scmp.ne.s32.totalorder %s264, %s265
    %p277 = scmp.eq.s32.totalorder %s25, 7
    %p278 = por %p276, %p277
    %p280 = scmp.ne.s32.totalorder %s265, %s279
    %p281 = scmp.eq.s32.totalorder %s25, 0
    %p282 = por %p280, %p281
    %s284 = sadd.s32 %s283, 1
    %p287 = scmp.eq.s32.totalorder %s19, 7
    %p288 = scmp.ne.s32.totalorder %s283, %s285
    %p289 = scmp.eq.s32.totalorder %s19, 0
    %p290 = por %p288, %p289
    %p291 = scmp.ne.s32.totalorder %s283, %s285
    %p292 = scmp.eq.s32.totalorder %s24, 7
    %p293 = por %p291, %p292
    %p294 = scmp.ne.s32.totalorder %s285, %s286
    %p295 = scmp.eq.s32.totalorder %s24, 0
    %p296 = por %p294, %p295
    %p297 = scmp.ne.s32.totalorder %s285, %s286
    %p298 = scmp.eq.s32.totalorder %s25, 7
    %p299 = por %p297, %p298
    %p301 = scmp.ne.s32.totalorder %s286, %s300
    %p302 = scmp.eq.s32.totalorder %s25, 0
    %p303 = por %p301, %p302
    %s305 = sadd.s32 %s304, 1
    %p308 = scmp.eq.s32.totalorder %s19, 7
    %p309 = scmp.ne.s32.totalorder %s304, %s306
    %p310 = scmp.eq.s32.totalorder %s19, 0
    %p311 = por %p309, %p310
    %p312 = scmp.ne.s32.totalorder %s304, %s306
    %p313 = scmp.eq.s32.totalorder %s24, 7
    %p314 = por %p312, %p313
    %p315 = scmp.ne.s32.totalorder %s306, %s307
    %p316 = scmp.eq.s32.totalorder %s24, 0
    %p317 = por %p315, %p316
    %p318 = scmp.ne.s32.totalorder %s306, %s307
    %p319 = scmp.eq.s32.totalorder %s25, 7
    %p320 = por %p318, %p319
    %p322 = scmp.ne.s32.totalorder %s307, %s321
    %p323 = scmp.eq.s32.totalorder %s25, 0
    %p324 = por %p322, %p323
    %s325 = ssub.s32 %s19, %s26
    %p326 = scmp.eq.s32.totalorder %s325, 0
    %s328 = sadd.s32 %s327, 1
    %s329 = scalar_select %p326, %s327, %s328
    %p332 = pneg %p326
    %p333 = scmp.eq.s32.totalorder %s19, 7
    %p334 = por %p332, %p333
    %p335 = scmp.ne.s32.totalorder %s327, %s330
    %p336 = scmp.eq.s32.totalorder %s19, 0
    %p337 = por %p335, %p336
    %p338 = scmp.ne.s32.totalorder %s327, %s330
    %p339 = scmp.eq.s32.totalorder %s24, 7
    %p340 = por %p338, %p339
    %p341 = scmp.ne.s32.totalorder %s330, %s331
    %p342 = scmp.eq.s32.totalorder %s24, 0
    %p343 = por %p341, %p342
    %p344 = scmp.ne.s32.totalorder %s330, %s331
    %p345 = scmp.eq.s32.totalorder %s25, 7
    %p346 = por %p344, %p345
    %p348 = scmp.ne.s32.totalorder %s331, %s347
    %p349 = scmp.eq.s32.totalorder %s25, 0
    %p350 = por %p348, %p349
    %p351 = scmp.le.s32.totalorder 1, %s19
    %p352 = scmp.lt.s32.totalorder %s19, 9
    %p353 = pnand %p351, %p352
    %p354 = pneg %p353
    // Predicated region
    $region9: #{tpu_custom_call.1} parent=5 // pred_check
      _
    $region10: #{tpu_custom_call.1} parent=5 // pred_check_branch
      %356 = sbr.rel (%p353) target = $region12
    $region11: #{tpu_custom_call.1} parent=5 // pred_region
      %s357 = ssub.s32 %s19, 1
      // Predicated region
      $region13: #{tpu_custom_call.1} parent=11 // pred_check
        %p358 = pneg %p170
      $region14: #{tpu_custom_call.1} parent=11 // pred_check_branch
        %360 = sbr.rel (%p358) target = $region16
      $region15: #{tpu_custom_call.1} parent=11 // pred_region
        _
      $region16: #{tpu_custom_call.1} parent=11 // pred_fallthru
        _
      // Predicated region
      $region17: #{tpu_custom_call.1} parent=11 // pred_check
        %p361 = pneg %p191
      $region18: #{tpu_custom_call.1} parent=11 // pred_check_branch
        %363 = sbr.rel (%p361) target = $region20
      $region19: #{tpu_custom_call.1} parent=11 // pred_region
        _
      $region20: #{tpu_custom_call.1} parent=11 // pred_fallthru
        _
      // Predicated region
      $region21: #{tpu_custom_call.1} parent=11 // pred_check
        %p364 = pneg %p212
      $region22: #{tpu_custom_call.1} parent=11 // pred_check_branch
        %366 = sbr.rel (%p364) target = $region24
      $region23: #{tpu_custom_call.1} parent=11 // pred_region
        _
      $region24: #{tpu_custom_call.1} parent=11 // pred_fallthru
        _
      // Predicated region
      $region25: #{tpu_custom_call.1} parent=11 // pred_check
        %p367 = pneg %p233
      $region26: #{tpu_custom_call.1} parent=11 // pred_check_branch
        %369 = sbr.rel (%p367) target = $region28
      $region27: #{tpu_custom_call.1} parent=11 // pred_region
        _
      $region28: #{tpu_custom_call.1} parent=11 // pred_fallthru
        _
      // Predicated region
      $region29: #{tpu_custom_call.1} parent=11 // pred_check
        %p370 = pneg %p254
      $region30: #{tpu_custom_call.1} parent=11 // pred_check_branch
        %372 = sbr.rel (%p370) target = $region32
      $region31: #{tpu_custom_call.1} parent=11 // pred_region
        _
      $region32: #{tpu_custom_call.1} parent=11 // pred_fallthru
        _
      // Predicated region
      $region33: #{tpu_custom_call.1} parent=11 // pred_check
        %p373 = pneg %p275
      $region34: #{tpu_custom_call.1} parent=11 // pred_check_branch
        %375 = sbr.rel (%p373) target = $region36
      $region35: #{tpu_custom_call.1} parent=11 // pred_region
        _
      $region36: #{tpu_custom_call.1} parent=11 // pred_fallthru
        _
      // Predicated region
      $region37: #{tpu_custom_call.1} parent=11 // pred_check
        %p376 = pneg %p296
      $region38: #{tpu_custom_call.1} parent=11 // pred_check_branch
        %378 = sbr.rel (%p376) target = $region40
      $region39: #{tpu_custom_call.1} parent=11 // pred_region
        _
      $region40: #{tpu_custom_call.1} parent=11 // pred_fallthru
        _
      // Predicated region
      $region41: #{tpu_custom_call.1} parent=11 // pred_check
        %p379 = pneg %p317
      $region42: #{tpu_custom_call.1} parent=11 // pred_check_branch
        %381 = sbr.rel (%p379) target = $region44
      $region43: #{tpu_custom_call.1} parent=11 // pred_region
        _
      $region44: #{tpu_custom_call.1} parent=11 // pred_fallthru
        _
    $region12: #{tpu_custom_call.1} parent=5 // pred_fallthru
      _
    %p382 = scmp.lt.s32.totalorder %s19, 8
    // Predicated region
    $region45: #{tpu_custom_call.1} parent=5 // pred_check
      %p383 = pneg %p382
    $region46: #{tpu_custom_call.1} parent=5 // pred_check_branch
      %385 = sbr.rel (%p383) target = $region48
    $region47: #{tpu_custom_call.1} parent=5 // pred_region
      // Predicated region
      $region49: #{tpu_custom_call.1} parent=47 // pred_check
        %p386 = pneg %p39
      $region50: #{tpu_custom_call.1} parent=47 // pred_check_branch
        %388 = sbr.rel (%p386) target = $region52
      $region51: #{tpu_custom_call.1} parent=47 // pred_region
        %s389 = smul.u32 16, %s19
        %p390 = scmp.lt.s32.totalorder %s389, 127
        %s391 = scalar_select %p390, %s389, 127
        %s392 = smul.addr %s391, 8
        %s393 = scalar_lea.vmem %s0, %s392
        %s394 = smul.u32 16, %s19
      $region52: #{tpu_custom_call.1} parent=47 // pred_fallthru
        _
      // Predicated region
      $region53: #{tpu_custom_call.1} parent=47 // pred_check
        %p395 = pneg %p65
      $region54: #{tpu_custom_call.1} parent=47 // pred_check_branch
        %397 = sbr.rel (%p395) target = $region56
      $region55: #{tpu_custom_call.1} parent=47 // pred_region
        %s398 = smul.u32 16, %s19
        %p399 = scmp.lt.s32.totalorder %s398, 127
        %s400 = scalar_select %p399, %s398, 127
        %s401 = smul.addr %s400, 8
        %s402 = scalar_lea.vmem %s1, %s401
        %s403 = smul.u32 16, %s19
      $region56: #{tpu_custom_call.1} parent=47 // pred_fallthru
        _
      // Predicated region
      $region57: #{tpu_custom_call.1} parent=47 // pred_check
        %p404 = pneg %p91
      $region58: #{tpu_custom_call.1} parent=47 // pred_check_branch
        %406 = sbr.rel (%p404) target = $region60
      $region59: #{tpu_custom_call.1} parent=47 // pred_region
        %s407 = smul.u32 16, %s19
        %p408 = scmp.lt.s32.totalorder %s407, 127
        %s409 = scalar_select %p408, %s407, 127
        %s410 = smul.addr %s409, 8
        %s411 = scalar_lea.vmem %s2, %s410
        %s412 = smul.u32 16, %s19
      $region60: #{tpu_custom_call.1} parent=47 // pred_fallthru
        _
      // Predicated region
      $region61: #{tpu_custom_call.1} parent=47 // pred_check
        %p413 = pneg %p117
      $region62: #{tpu_custom_call.1} parent=47 // pred_check_branch
        %415 = sbr.rel (%p413) target = $region64
      $region63: #{tpu_custom_call.1} parent=47 // pred_region
        %s416 = smul.u32 2, %s19
        %p417 = scmp.lt.s32.totalorder %s416, 15
        %s418 = scalar_select %p417, %s416, 15
        %s419 = smul.addr %s418, 8
        %s420 = scalar_lea.vmem %s3, %s419
        %s421 = smul.u32 2, %s19
      $region64: #{tpu_custom_call.1} parent=47 // pred_fallthru
        _
      // Predicated region
      $region65: #{tpu_custom_call.1} parent=47 // pred_check
        %p422 = pneg %p143
      $region66: #{tpu_custom_call.1} parent=47 // pred_check_branch
        %424 = sbr.rel (%p422) target = $region68
      $region67: #{tpu_custom_call.1} parent=47 // pred_region
        %s425 = smul.u32 2, %s19
        %p426 = scmp.lt.s32.totalorder %s425, 15
        %s427 = scalar_select %p426, %s425, 15
        %s428 = smul.addr %s427, 8
        %s429 = scalar_lea.vmem %s4, %s428
        %s430 = smul.u32 2, %s19
      $region68: #{tpu_custom_call.1} parent=47 // pred_fallthru
        _
    $region48: #{tpu_custom_call.1} parent=5 // pred_fallthru
      _
    %p431 = scmp.le.s32.totalorder 1, %s19
    %p432 = scmp.lt.s32.totalorder %s19, 9
    %p433 = pnand %p431, %p432
    %p434 = pneg %p433
    // Predicated region
    $region69: #{tpu_custom_call.1} parent=5 // pred_check
      _
    $region70: #{tpu_custom_call.1} parent=5 // pred_check_branch
      %436 = sbr.rel (%p433) target = $region72
    $region71: #{tpu_custom_call.1} parent=5 // pred_region
      %s437 = ssub.s32 %s19, 1
      %s438 = smul.u32 16, %s24
      %p439 = scmp.lt.s32.totalorder %s438, 127
      %s440 = scalar_select %p439, %s438, 127
      %s441 = smul.addr %s440, 8
      %s442 = scalar_lea.vmem %s0, %s441
      %p443 = pneg %p45
      %p444 = pneg %p42
      %s445 = smul.u32 16, %s24
      %p446 = scmp.lt.s32.totalorder %s445, 127
      %s447 = scalar_select %p446, %s445, 127
      %s448 = smul.addr %s447, 8
      %s449 = scalar_lea.vmem %s1, %s448
      %p450 = pneg %p71
      %p451 = pneg %p68
      %s452 = smul.u32 16, %s24
      %p453 = scmp.lt.s32.totalorder %s452, 127
      %s454 = scalar_select %p453, %s452, 127
      %s455 = smul.addr %s454, 8
      %s456 = scalar_lea.vmem %s2, %s455
      %p457 = pneg %p97
      %p458 = pneg %p94
      %s459 = smul.u32 2, %s24
      %p460 = scmp.lt.s32.totalorder %s459, 15
      %s461 = scalar_select %p460, %s459, 15
      %s462 = smul.addr %s461, 8
      %s463 = scalar_lea.vmem %s3, %s462
      %p464 = pneg %p123
      %p465 = pneg %p120
      %s466 = smul.u32 2, %s24
      %p467 = scmp.lt.s32.totalorder %s466, 15
      %s468 = scalar_select %p467, %s466, 15
      %s469 = smul.addr %s468, 8
      %s470 = scalar_lea.vmem %s4, %s469
      %p471 = pneg %p149
      %p472 = pneg %p146
      %p473 = pneg %p170
      %p474 = pneg %p167
      %p475 = pneg %p191
      %p476 = pneg %p188
      %p477 = pneg %p212
      %p478 = pneg %p209
      %p479 = pneg %p233
      %p480 = pneg %p230
      %p481 = pneg %p254
      %p482 = pneg %p251
      %p483 = pneg %p275
      %p484 = pneg %p272
      %p485 = pneg %p296
      %p486 = pneg %p293
      %p487 = pneg %p317
      %p488 = pneg %p314
      %p489 = pneg %p343
      %p490 = pneg %p340
      %p491 = scmp.lt.s32.totalorder %s24, 7
      %s492 = scalar_select %p491, %s24, 7
      %s493 = smul.addr %s492, 8
      %s494 = scalar_lea.vmem %s13, %s493
      %s495 = smul.u32 16, %s24
      %p496 = scmp.lt.s32.totalorder %s495, 127
      %s497 = scalar_select %p496, %s495, 127
      %s498 = smul.addr %s497, 8
      %s499 = scalar_lea.vmem %s0, %s498
      %s500 = smul.u32 16, %s24
      %s501 = smul.u32 16, %s24
      %p502 = scmp.lt.s32.totalorder %s501, 127
      %s503 = scalar_select %p502, %s501, 127
      %s504 = smul.addr %s503, 8
      %s505 = scalar_lea.vmem %s1, %s504
      %s506 = smul.u32 16, %s24
      %s507 = smul.u32 16, %s24
      %p508 = scmp.lt.s32.totalorder %s507, 127
      %s509 = scalar_select %p508, %s507, 127
      %s510 = smul.addr %s509, 8
      %s511 = scalar_lea.vmem %s2, %s510
      %s512 = smul.u32 16, %s24
      %s513 = smul.u32 2, %s24
      %p514 = scmp.lt.s32.totalorder %s513, 15
      %s515 = scalar_select %p514, %s513, 15
      %s516 = smul.addr %s515, 8
      %s517 = scalar_lea.vmem %s3, %s516
      %s518 = smul.u32 2, %s24
      %s519 = smul.u32 2, %s24
      %p520 = scmp.lt.s32.totalorder %s519, 15
      %s521 = scalar_select %p520, %s519, 15
      %s522 = smul.addr %s521, 8
      %s523 = scalar_lea.vmem %s4, %s522
      %s524 = smul.u32 2, %s24
      %p525 = scmp.lt.s32.totalorder %s24, 7
      %s526 = scalar_select %p525, %s24, 7
      %s527 = smul.addr %s526, 8
      %s528 = scalar_lea.vmem %s13, %s527
      %v529 = vld [vmem:[%s499] sm:$0xff]
      %v530 = vld [vmem:[%s499 + $0x8] sm:$0xff]
      %v531 = vld [vmem:[%s499 + $0x10] sm:$0xff]
      %v532 = vld [vmem:[%s499 + $0x18] sm:$0xff]
      %v533 = vld [vmem:[%s499 + $0x20] sm:$0xff]
      %v534 = vld [vmem:[%s499 + $0x28] sm:$0xff]
      %v535 = vld [vmem:[%s499 + $0x30] sm:$0xff]
      %v536 = vld [vmem:[%s499 + $0x38] sm:$0xff]
      %v537 = vld [vmem:[%s499 + $0x40] sm:$0xff]
      %v538 = vld [vmem:[%s499 + $0x48] sm:$0xff]
      %v539 = vld [vmem:[%s499 + $0x50] sm:$0xff]
      %v540 = vld [vmem:[%s499 + $0x58] sm:$0xff]
      %v541 = vld [vmem:[%s499 + $0x60] sm:$0xff]
      %v542 = vld [vmem:[%s499 + $0x68] sm:$0xff]
      %v543 = vld [vmem:[%s499 + $0x70] sm:$0xff]
      %v544 = vld [vmem:[%s499 + $0x78] sm:$0xff]
      %v545 = vld [vmem:[%s505] sm:$0xff]
      %v546 = vld [vmem:[%s505 + $0x8] sm:$0xff]
      %v547 = vld [vmem:[%s505 + $0x10] sm:$0xff]
      %v548 = vld [vmem:[%s505 + $0x18] sm:$0xff]
      %v549 = vld [vmem:[%s505 + $0x20] sm:$0xff]
      %v550 = vld [vmem:[%s505 + $0x28] sm:$0xff]
      %v551 = vld [vmem:[%s505 + $0x30] sm:$0xff]
      %v552 = vld [vmem:[%s505 + $0x38] sm:$0xff]
      %v553 = vld [vmem:[%s505 + $0x40] sm:$0xff]
      %v554 = vld [vmem:[%s505 + $0x48] sm:$0xff]
      %v555 = vld [vmem:[%s505 + $0x50] sm:$0xff]
      %v556 = vld [vmem:[%s505 + $0x58] sm:$0xff]
      %v557 = vld [vmem:[%s505 + $0x60] sm:$0xff]
      %v558 = vld [vmem:[%s505 + $0x68] sm:$0xff]
      %v559 = vld [vmem:[%s505 + $0x70] sm:$0xff]
      %v560 = vld [vmem:[%s505 + $0x78] sm:$0xff]
      %v561 = vld [vmem:[%s5] sm:$0xff]
      %v562 = vld [vmem:[%s5 + $0x8] sm:$0xff]
      %v563 = vld [vmem:[%s5 + $0x10] sm:$0xff]
      %v564 = vld [vmem:[%s5 + $0x18] sm:$0xff]
      %vm565 = vcmask 261120
      %v567 = vsel %vm565, %v545, 0
      %v570 = vsel %vm565, %v546, 0
      %v573 = vsel %vm565, %v547, 0
      %v576 = vsel %vm565, %v548, 0
      %v579 = vsel %vm565, %v549, 0
      %v582 = vsel %vm565, %v550, 0
      %v585 = vsel %vm565, %v551, 0
      %v588 = vsel %vm565, %v552, 0
      %v591 = vsel %vm565, %v553, 0
      %v594 = vsel %vm565, %v554, 0
      %v597 = vsel %vm565, %v555, 0
      %v600 = vsel %vm565, %v556, 0
      %v603 = vsel %vm565, %v557, 0
      %v606 = vsel %vm565, %v558, 0
      %v609 = vsel %vm565, %v559, 0
      %v612 = vsel %vm565, %v560, 0
      %614 = vmatprep.subr.mxu0 0.0
      %615 = vmatpush1.msra.mxu0 0.0
      %616 = vmatprep.subr.mxu0 0.0
      %617 = vmatpush1.msra.mxu0 0.0
      %618 = vmatprep.subr.mxu0 0.0
      %619 = vmatpush1.msra.mxu0 0.0
      %620 = vmatprep.subr.mxu0 0.0
      %621 = vmatpush1.msra.mxu0 0.0
      %622 = vmatprep.subr.mxu0 0.0
      %623 = vmatpush1.msra.mxu0 0.0
      %624 = vmatprep.subr.mxu0 0.0
      %625 = vmatpush1.msra.mxu0 0.0
      %626 = vmatprep.subr.mxu0 0.0
      %627 = vmatpush1.msra.mxu0 0.0
      %628 = vmatprep.subr.mxu0 0.0
      %629 = vmatpush1.msra.mxu0 0.0
      %630 = vmatprep.subr.mxu0 0.0
      %631 = vmatpush1.msra.mxu0 0.0
      %632 = vmatprep.subr.mxu0 0.0
      %633 = vmatpush1.msra.mxu0 0.0
      %634 = vmatprep.subr.mxu0 0.0
      %635 = vmatpush1.msra.mxu0 0.0
      %636 = vmatprep.subr.mxu0 0.0
      %637 = vmatpush1.msra.mxu0 0.0
      %638 = vmatprep.subr.mxu0 0.0
      %639 = vmatpush1.msra.mxu0 %v564
      %640 = vmatprep.subr.mxu0 0.0
      %641 = vmatpush1.msra.mxu0 %v563
      %642 = vmatprep.subr.mxu0 0.0
      %643 = vmatpush1.msra.mxu0 %v562
      %644 = vmatprep.subr.mxu0 0.0
      %645 = vmatpush1.msra.mxu0 %v561
      %646 = vmatprep.subr.mxu0 0.0
      %647 = vmatpush2.msra.mxu0 0.0
      %648 = vmatprep.subr.mxu0 0.0
      %649 = vmatpush2.msra.mxu0 0.0
      %650 = vmatprep.subr.mxu0 0.0
      %651 = vmatpush2.msra.mxu0 0.0
      %652 = vmatprep.subr.mxu0 0.0
      %653 = vmatpush2.msra.mxu0 0.0
      %654 = vmatprep.subr.mxu0 0.0
      %655 = vmatpush2.msra.mxu0 0.0
      %656 = vmatprep.subr.mxu0 0.0
      %657 = vmatpush2.msra.mxu0 0.0
      %658 = vmatprep.subr.mxu0 0.0
      %659 = vmatpush2.msra.mxu0 0.0
      %660 = vmatprep.subr.mxu0 0.0
      %661 = vmatpush2.msra.mxu0 0.0
      %662 = vmatprep.subr.mxu0 0.0
      %663 = vmatpush2.msra.mxu0 0.0
      %664 = vmatprep.subr.mxu0 0.0
      %665 = vmatpush2.msra.mxu0 0.0
      %666 = vmatprep.subr.mxu0 0.0
      %667 = vmatpush2.msra.mxu0 0.0
      %668 = vmatprep.subr.mxu0 0.0
      %669 = vmatpush2.msra.mxu0 0.0
      %670 = vmatprep.subr.mxu0 0.0
      %671 = vmatpush2.msra.mxu0 0.0
      %672 = vmatprep.subr.mxu0 0.0
      %673 = vmatpush2.msra.mxu0 0.0
      %674 = vmatprep.subr.mxu0 0.0
      %675 = vmatpush2.msra.mxu0 0.0
      %676 = vmatprep.subr.mxu0 0.0
      %677 = vmatpush2.msra.mxu0 0.0
      %678 = vmatprep.mubr.f32.mxu0 0.0
      %679 = vmatmul.mubr.f32.gmra.mxu0 %v567
      %v680 = vpop.f32.mrf.mxu0
      %v681 = vadd.f32 0.0, %v680
      %v682 = vpop.f32.mrf.mxu0
      %683 = vmatprep.mubr.f32.mxu0 0.0
      %684 = vmatmul.mubr.f32.gmra.mxu0 %v570
      %v685 = vpop.f32.mrf.mxu0
      %v686 = vadd.f32 0.0, %v685
      %v687 = vpop.f32.mrf.mxu0
      %688 = vmatprep.mubr.f32.mxu0 0.0
      %689 = vmatmul.mubr.f32.gmra.mxu0 %v573
      %v690 = vpop.f32.mrf.mxu0
      %v691 = vadd.f32 0.0, %v690
      %v692 = vpop.f32.mrf.mxu0
      %693 = vmatprep.mubr.f32.mxu0 0.0
      %694 = vmatmul.mubr.f32.gmra.mxu0 %v576
      %v695 = vpop.f32.mrf.mxu0
      %v696 = vadd.f32 0.0, %v695
      %v697 = vpop.f32.mrf.mxu0
      %698 = vmatprep.mubr.f32.mxu0 0.0
      %699 = vmatmul.mubr.f32.gmra.mxu0 %v579
      %v700 = vpop.f32.mrf.mxu0
      %v701 = vadd.f32 0.0, %v700
      %v702 = vpop.f32.mrf.mxu0
      %703 = vmatprep.mubr.f32.mxu0 0.0
      %704 = vmatmul.mubr.f32.gmra.mxu0 %v582
      %v705 = vpop.f32.mrf.mxu0
      %v706 = vadd.f32 0.0, %v705
      %v707 = vpop.f32.mrf.mxu0
      %708 = vmatprep.mubr.f32.mxu0 0.0
      %709 = vmatmul.mubr.f32.gmra.mxu0 %v585
      %v710 = vpop.f32.mrf.mxu0
      %v711 = vadd.f32 0.0, %v710
      %v712 = vpop.f32.mrf.mxu0
      %713 = vmatprep.mubr.f32.mxu0 0.0
      %714 = vmatmul.mubr.f32.gmra.mxu0 %v588
      %v715 = vpop.f32.mrf.mxu0
      %v716 = vadd.f32 0.0, %v715
      %v717 = vpop.f32.mrf.mxu0
      %718 = vmatprep.mubr.f32.mxu0 0.0
      %719 = vmatmul.mubr.f32.gmra.mxu0 %v591
      %v720 = vpop.f32.mrf.mxu0
      %v721 = vadd.f32 0.0, %v720
      %v722 = vpop.f32.mrf.mxu0
      %723 = vmatprep.mubr.f32.mxu0 0.0
      %724 = vmatmul.mubr.f32.gmra.mxu0 %v594
      %v725 = vpop.f32.mrf.mxu0
      %v726 = vadd.f32 0.0, %v725
      %v727 = vpop.f32.mrf.mxu0
      %728 = vmatprep.mubr.f32.mxu0 0.0
      %729 = vmatmul.mubr.f32.gmra.mxu0 %v597
      %v730 = vpop.f32.mrf.mxu0
      %v731 = vadd.f32 0.0, %v730
      %v732 = vpop.f32.mrf.mxu0
      %733 = vmatprep.mubr.f32.mxu0 0.0
      %734 = vmatmul.mubr.f32.gmra.mxu0 %v600
      %v735 = vpop.f32.mrf.mxu0
      %v736 = vadd.f32 0.0, %v735
      %v737 = vpop.f32.mrf.mxu0
      %738 = vmatprep.mubr.f32.mxu0 0.0
      %739 = vmatmul.mubr.f32.gmra.mxu0 %v603
      %v740 = vpop.f32.mrf.mxu0
      %v741 = vadd.f32 0.0, %v740
      %v742 = vpop.f32.mrf.mxu0
      %743 = vmatprep.mubr.f32.mxu0 0.0
      %744 = vmatmul.mubr.f32.gmra.mxu0 %v606
      %v745 = vpop.f32.mrf.mxu0
      %v746 = vadd.f32 0.0, %v745
      %v747 = vpop.f32.mrf.mxu0
      %748 = vmatprep.mubr.f32.mxu0 0.0
      %749 = vmatmul.mubr.f32.gmra.mxu0 %v609
      %v750 = vpop.f32.mrf.mxu0
      %v751 = vadd.f32 0.0, %v750
      %v752 = vpop.f32.mrf.mxu0
      %753 = vmatprep.mubr.f32.mxu0 0.0
      %754 = vmatmul.mubr.f32.gmra.mxu0 %v612
      %v755 = vpop.f32.mrf.mxu0
      %v756 = vadd.f32 0.0, %v755
      %v757 = vpop.f32.mrf.mxu0
      %758 = vdwg.mxu0
      %v759 = vld [vmem:[%s6] sm:$0xff]
      %v760 = vld [vmem:[%s6 + $0x8] sm:$0xff]
      %v761 = vld [vmem:[%s6 + $0x10] sm:$0xff]
      %v762 = vld [vmem:[%s6 + $0x18] sm:$0xff]
      %v763 = vld [vmem:[%s6 + $0x20] sm:$0xff]
      %v764 = vld [vmem:[%s6 + $0x28] sm:$0xff]
      %v765 = vld [vmem:[%s6 + $0x30] sm:$0xff]
      %v766 = vld [vmem:[%s6 + $0x38] sm:$0xff]
      %v767 = vld [vmem:[%s6 + $0x40] sm:$0xff]
      %v768 = vld [vmem:[%s6 + $0x48] sm:$0xff]
      %v769 = vld [vmem:[%s6 + $0x50] sm:$0xff]
      %v770 = vld [vmem:[%s6 + $0x58] sm:$0xff]
      %v771 = vld [vmem:[%s6 + $0x60] sm:$0xff]
      %v772 = vld [vmem:[%s6 + $0x68] sm:$0xff]
      %v773 = vld [vmem:[%s6 + $0x70] sm:$0xff]
      %v774 = vld [vmem:[%s6 + $0x78] sm:$0xff]
      %775 = vmatprep.subr.mxu0 0.0
      %776 = vmatpush1.msra.mxu0 %v756
      %777 = vmatprep.subr.mxu0 0.0
      %778 = vmatpush1.msra.mxu0 %v751
      %779 = vmatprep.subr.mxu0 0.0
      %780 = vmatpush1.msra.mxu0 %v746
      %781 = vmatprep.subr.mxu0 0.0
      %782 = vmatpush1.msra.mxu0 %v741
      %783 = vmatprep.subr.mxu0 0.0
      %784 = vmatpush1.msra.mxu0 %v736
      %785 = vmatprep.subr.mxu0 0.0
      %786 = vmatpush1.msra.mxu0 %v731
      %787 = vmatprep.subr.mxu0 0.0
      %788 = vmatpush1.msra.mxu0 %v726
      %789 = vmatprep.subr.mxu0 0.0
      %790 = vmatpush1.msra.mxu0 %v721
      %791 = vmatprep.subr.mxu0 0.0
      %792 = vmatpush1.msra.mxu0 %v716
      %793 = vmatprep.subr.mxu0 0.0
      %794 = vmatpush1.msra.mxu0 %v711
      %795 = vmatprep.subr.mxu0 0.0
      %796 = vmatpush1.msra.mxu0 %v706
      %797 = vmatprep.subr.mxu0 0.0
      %798 = vmatpush1.msra.mxu0 %v701
      %799 = vmatprep.subr.mxu0 0.0
      %800 = vmatpush1.msra.mxu0 %v696
      %801 = vmatprep.subr.mxu0 0.0
      %802 = vmatpush1.msra.mxu0 %v691
      %803 = vmatprep.subr.mxu0 0.0
      %804 = vmatpush1.msra.mxu0 %v686
      %805 = vmatprep.subr.mxu0 0.0
      %806 = vmatpush1.msra.mxu0 %v681
      %807 = vmatprep.subr.mxu0 0.0
      %808 = vmatpush2.msra.mxu0 0.0
      %809 = vmatprep.subr.mxu0 0.0
      %810 = vmatpush2.msra.mxu0 0.0
      %811 = vmatprep.subr.mxu0 0.0
      %812 = vmatpush2.msra.mxu0 0.0
      %813 = vmatprep.subr.mxu0 0.0
      %814 = vmatpush2.msra.mxu0 0.0
      %815 = vmatprep.subr.mxu0 0.0
      %816 = vmatpush2.msra.mxu0 0.0
      %817 = vmatprep.subr.mxu0 0.0
      %818 = vmatpush2.msra.mxu0 0.0
      %819 = vmatprep.subr.mxu0 0.0
      %820 = vmatpush2.msra.mxu0 0.0
      %821 = vmatprep.subr.mxu0 0.0
      %822 = vmatpush2.msra.mxu0 0.0
      %823 = vmatprep.subr.mxu0 0.0
      %824 = vmatpush2.msra.mxu0 0.0
      %825 = vmatprep.subr.mxu0 0.0
      %826 = vmatpush2.msra.mxu0 0.0
      %827 = vmatprep.subr.mxu0 0.0
      %828 = vmatpush2.msra.mxu0 0.0
      %829 = vmatprep.subr.mxu0 0.0
      %830 = vmatpush2.msra.mxu0 0.0
      %831 = vmatprep.subr.mxu0 0.0
      %832 = vmatpush2.msra.mxu0 0.0
      %833 = vmatprep.subr.mxu0 0.0
      %834 = vmatpush2.msra.mxu0 0.0
      %835 = vmatprep.subr.mxu0 0.0
      %836 = vmatpush2.msra.mxu0 0.0
      %837 = vmatprep.subr.mxu0 0.0
      %838 = vmatpush2.msra.mxu0 0.0
      %839 = vmatprep.mubr.f32.mxu0 0.0
      %840 = vmatmul.mubr.f32.gmra.mxu0 %v529
      %v841 = vpop.f32.mrf.mxu0
      %v842 = vadd.f32 %v759, %v841
      %v843 = vpop.f32.mrf.mxu0
      %844 = vmatprep.mubr.f32.mxu0 0.0
      %845 = vmatmul.mubr.f32.gmra.mxu0 %v530
      %v846 = vpop.f32.mrf.mxu0
      %v847 = vadd.f32 %v760, %v846
      %v848 = vpop.f32.mrf.mxu0
      %849 = vmatprep.mubr.f32.mxu0 0.0
      %850 = vmatmul.mubr.f32.gmra.mxu0 %v531
      %v851 = vpop.f32.mrf.mxu0
      %v852 = vadd.f32 %v761, %v851
      %v853 = vpop.f32.mrf.mxu0
      %854 = vmatprep.mubr.f32.mxu0 0.0
      %855 = vmatmul.mubr.f32.gmra.mxu0 %v532
      %v856 = vpop.f32.mrf.mxu0
      %v857 = vadd.f32 %v762, %v856
      %v858 = vpop.f32.mrf.mxu0
      %859 = vmatprep.mubr.f32.mxu0 0.0
      %860 = vmatmul.mubr.f32.gmra.mxu0 %v533
      %v861 = vpop.f32.mrf.mxu0
      %v862 = vadd.f32 %v763, %v861
      %v863 = vpop.f32.mrf.mxu0
      %864 = vmatprep.mubr.f32.mxu0 0.0
      %865 = vmatmul.mubr.f32.gmra.mxu0 %v534
      %v866 = vpop.f32.mrf.mxu0
      %v867 = vadd.f32 %v764, %v866
      %v868 = vpop.f32.mrf.mxu0
      %869 = vmatprep.mubr.f32.mxu0 0.0
      %870 = vmatmul.mubr.f32.gmra.mxu0 %v535
      %v871 = vpop.f32.mrf.mxu0
      %v872 = vadd.f32 %v765, %v871
      %v873 = vpop.f32.mrf.mxu0
      %874 = vmatprep.mubr.f32.mxu0 0.0
      %875 = vmatmul.mubr.f32.gmra.mxu0 %v536
      %v876 = vpop.f32.mrf.mxu0
      %v877 = vadd.f32 %v766, %v876
      %v878 = vpop.f32.mrf.mxu0
      %879 = vmatprep.mubr.f32.mxu0 0.0
      %880 = vmatmul.mubr.f32.gmra.mxu0 %v537
      %v881 = vpop.f32.mrf.mxu0
      %v882 = vadd.f32 %v767, %v881
      %v883 = vpop.f32.mrf.mxu0
      %884 = vmatprep.mubr.f32.mxu0 0.0
      %885 = vmatmul.mubr.f32.gmra.mxu0 %v538
      %v886 = vpop.f32.mrf.mxu0
      %v887 = vadd.f32 %v768, %v886
      %v888 = vpop.f32.mrf.mxu0
      %889 = vmatprep.mubr.f32.mxu0 0.0
      %890 = vmatmul.mubr.f32.gmra.mxu0 %v539
      %v891 = vpop.f32.mrf.mxu0
      %v892 = vadd.f32 %v769, %v891
      %v893 = vpop.f32.mrf.mxu0
      %894 = vmatprep.mubr.f32.mxu0 0.0
      %895 = vmatmul.mubr.f32.gmra.mxu0 %v540
      %v896 = vpop.f32.mrf.mxu0
      %v897 = vadd.f32 %v770, %v896
      %v898 = vpop.f32.mrf.mxu0
      %899 = vmatprep.mubr.f32.mxu0 0.0
      %900 = vmatmul.mubr.f32.gmra.mxu0 %v541
      %v901 = vpop.f32.mrf.mxu0
      %v902 = vadd.f32 %v771, %v901
      %v903 = vpop.f32.mrf.mxu0
      %904 = vmatprep.mubr.f32.mxu0 0.0
      %905 = vmatmul.mubr.f32.gmra.mxu0 %v542
      %v906 = vpop.f32.mrf.mxu0
      %v907 = vadd.f32 %v772, %v906
      %v908 = vpop.f32.mrf.mxu0
      %909 = vmatprep.mubr.f32.mxu0 0.0
      %910 = vmatmul.mubr.f32.gmra.mxu0 %v543
      %v911 = vpop.f32.mrf.mxu0
      %v912 = vadd.f32 %v773, %v911
      %v913 = vpop.f32.mrf.mxu0
      %914 = vmatprep.mubr.f32.mxu0 0.0
      %915 = vmatmul.mubr.f32.gmra.mxu0 %v544
      %v916 = vpop.f32.mrf.mxu0
      %v917 = vadd.f32 %v774, %v916
      %v918 = vpop.f32.mrf.mxu0
      %919 = vdwg.mxu0
      %v920 = vmax.f32 %v842, 0.0
      %v921 = vmax.f32 %v847, 0.0
      %v922 = vmax.f32 %v852, 0.0
      %v923 = vmax.f32 %v857, 0.0
      %v924 = vmax.f32 %v862, 0.0
      %v925 = vmax.f32 %v867, 0.0
      %v926 = vmax.f32 %v872, 0.0
      %v927 = vmax.f32 %v877, 0.0
      %v928 = vmax.f32 %v882, 0.0
      %v929 = vmax.f32 %v887, 0.0
      %v930 = vmax.f32 %v892, 0.0
      %v931 = vmax.f32 %v897, 0.0
      %v932 = vmax.f32 %v902, 0.0
      %v933 = vmax.f32 %v907, 0.0
      %v934 = vmax.f32 %v912, 0.0
      %v935 = vmax.f32 %v917, 0.0
      %v936 = vld [vmem:[%s7] sm:$0xff]
      %v937 = vld [vmem:[%s7 + $0x8] sm:$0xff]
      %v938 = vld [vmem:[%s7 + $0x10] sm:$0xff]
      %v939 = vld [vmem:[%s7 + $0x18] sm:$0xff]
      %v940 = vld [vmem:[%s7 + $0x20] sm:$0xff]
      %v941 = vld [vmem:[%s7 + $0x28] sm:$0xff]
      %v942 = vld [vmem:[%s7 + $0x30] sm:$0xff]
      %v943 = vld [vmem:[%s7 + $0x38] sm:$0xff]
      %v944 = vld [vmem:[%s511] sm:$0xff]
      %v945 = vld [vmem:[%s511 + $0x8] sm:$0xff]
      %v946 = vld [vmem:[%s511 + $0x10] sm:$0xff]
      %v947 = vld [vmem:[%s511 + $0x18] sm:$0xff]
      %v948 = vld [vmem:[%s511 + $0x20] sm:$0xff]
      %v949 = vld [vmem:[%s511 + $0x28] sm:$0xff]
      %v950 = vld [vmem:[%s511 + $0x30] sm:$0xff]
      %v951 = vld [vmem:[%s511 + $0x38] sm:$0xff]
      %v952 = vld [vmem:[%s511 + $0x40] sm:$0xff]
      %v953 = vld [vmem:[%s511 + $0x48] sm:$0xff]
      %v954 = vld [vmem:[%s511 + $0x50] sm:$0xff]
      %v955 = vld [vmem:[%s511 + $0x58] sm:$0xff]
      %v956 = vld [vmem:[%s511 + $0x60] sm:$0xff]
      %v957 = vld [vmem:[%s511 + $0x68] sm:$0xff]
      %v958 = vld [vmem:[%s511 + $0x70] sm:$0xff]
      %v959 = vld [vmem:[%s511 + $0x78] sm:$0xff]
      %v960 = vmax.f32 %v944, 0.0
      %v961 = vmax.f32 %v945, 0.0
      %v962 = vmax.f32 %v946, 0.0
      %v963 = vmax.f32 %v947, 0.0
      %v964 = vmax.f32 %v948, 0.0
      %v965 = vmax.f32 %v949, 0.0
      %v966 = vmax.f32 %v950, 0.0
      %v967 = vmax.f32 %v951, 0.0
      %v968 = vmax.f32 %v952, 0.0
      %v969 = vmax.f32 %v953, 0.0
      %v970 = vmax.f32 %v954, 0.0
      %v971 = vmax.f32 %v955, 0.0
      %v972 = vmax.f32 %v956, 0.0
      %v973 = vmax.f32 %v957, 0.0
      %v974 = vmax.f32 %v958, 0.0
      %v975 = vmax.f32 %v959, 0.0
      %v976 = vld [vmem:[%s8] sm:$0xff]
      %v977 = vld [vmem:[%s8 + $0x8] sm:$0xff]
      %v978 = vld [vmem:[%s8 + $0x10] sm:$0xff]
      %v979 = vld [vmem:[%s8 + $0x18] sm:$0xff]
      %v981 = vsel %vm565, %v960, 0
      %v984 = vsel %vm565, %v961, 0
      %v987 = vsel %vm565, %v962, 0
      %v990 = vsel %vm565, %v963, 0
      %v993 = vsel %vm565, %v964, 0
      %v996 = vsel %vm565, %v965, 0
      %v999 = vsel %vm565, %v966, 0
      %v1002 = vsel %vm565, %v967, 0
      %v1005 = vsel %vm565, %v968, 0
      %v1008 = vsel %vm565, %v969, 0
      %v1011 = vsel %vm565, %v970, 0
      %v1014 = vsel %vm565, %v971, 0
      %v1017 = vsel %vm565, %v972, 0
      %v1020 = vsel %vm565, %v973, 0
      %v1023 = vsel %vm565, %v974, 0
      %v1026 = vsel %vm565, %v975, 0
      %1028 = vmatprep.subr.mxu0 0.0
      %1029 = vmatpush1.msra.mxu0 0.0
      %1030 = vmatprep.subr.mxu0 0.0
      %1031 = vmatpush1.msra.mxu0 0.0
      %1032 = vmatprep.subr.mxu0 0.0
      %1033 = vmatpush1.msra.mxu0 0.0
      %1034 = vmatprep.subr.mxu0 0.0
      %1035 = vmatpush1.msra.mxu0 0.0
      %1036 = vmatprep.subr.mxu0 0.0
      %1037 = vmatpush1.msra.mxu0 0.0
      %1038 = vmatprep.subr.mxu0 0.0
      %1039 = vmatpush1.msra.mxu0 0.0
      %1040 = vmatprep.subr.mxu0 0.0
      %1041 = vmatpush1.msra.mxu0 0.0
      %1042 = vmatprep.subr.mxu0 0.0
      %1043 = vmatpush1.msra.mxu0 0.0
      %1044 = vmatprep.subr.mxu0 0.0
      %1045 = vmatpush1.msra.mxu0 0.0
      %1046 = vmatprep.subr.mxu0 0.0
      %1047 = vmatpush1.msra.mxu0 0.0
      %1048 = vmatprep.subr.mxu0 0.0
      %1049 = vmatpush1.msra.mxu0 0.0
      %1050 = vmatprep.subr.mxu0 0.0
      %1051 = vmatpush1.msra.mxu0 0.0
      %1052 = vmatprep.subr.mxu0 0.0
      %1053 = vmatpush1.msra.mxu0 %v979
      %1054 = vmatprep.subr.mxu0 0.0
      %1055 = vmatpush1.msra.mxu0 %v978
      %1056 = vmatprep.subr.mxu0 0.0
      %1057 = vmatpush1.msra.mxu0 %v977
      %1058 = vmatprep.subr.mxu0 0.0
      %1059 = vmatpush1.msra.mxu0 %v976
      %1060 = vmatprep.subr.mxu0 0.0
      %1061 = vmatpush2.msra.mxu0 0.0
      %1062 = vmatprep.subr.mxu0 0.0
      %1063 = vmatpush2.msra.mxu0 0.0
      %1064 = vmatprep.subr.mxu0 0.0
      %1065 = vmatpush2.msra.mxu0 0.0
      %1066 = vmatprep.subr.mxu0 0.0
      %1067 = vmatpush2.msra.mxu0 0.0
      %1068 = vmatprep.subr.mxu0 0.0
      %1069 = vmatpush2.msra.mxu0 0.0
      %1070 = vmatprep.subr.mxu0 0.0
      %1071 = vmatpush2.msra.mxu0 0.0
      %1072 = vmatprep.subr.mxu0 0.0
      %1073 = vmatpush2.msra.mxu0 0.0
      %1074 = vmatprep.subr.mxu0 0.0
      %1075 = vmatpush2.msra.mxu0 0.0
      %1076 = vmatprep.subr.mxu0 0.0
      %1077 = vmatpush2.msra.mxu0 0.0
      %1078 = vmatprep.subr.mxu0 0.0
      %1079 = vmatpush2.msra.mxu0 0.0
      %1080 = vmatprep.subr.mxu0 0.0
      %1081 = vmatpush2.msra.mxu0 0.0
      %1082 = vmatprep.subr.mxu0 0.0
      %1083 = vmatpush2.msra.mxu0 0.0
      %1084 = vmatprep.subr.mxu0 0.0
      %1085 = vmatpush2.msra.mxu0 0.0
      %1086 = vmatprep.subr.mxu0 0.0
      %1087 = vmatpush2.msra.mxu0 0.0
      %1088 = vmatprep.subr.mxu0 0.0
      %1089 = vmatpush2.msra.mxu0 0.0
      %1090 = vmatprep.subr.mxu0 0.0
      %1091 = vmatpush2.msra.mxu0 0.0
      %1092 = vmatprep.mubr.f32.mxu0 0.0
      %1093 = vmatmul.mubr.f32.gmra.mxu0 %v981
      %v1094 = vpop.f32.mrf.mxu0
      %v1095 = vadd.f32 0.0, %v1094
      %v1096 = vpop.f32.mrf.mxu0
      %1097 = vmatprep.mubr.f32.mxu0 0.0
      %1098 = vmatmul.mubr.f32.gmra.mxu0 %v984
      %v1099 = vpop.f32.mrf.mxu0
      %v1100 = vadd.f32 0.0, %v1099
      %v1101 = vpop.f32.mrf.mxu0
      %1102 = vmatprep.mubr.f32.mxu0 0.0
      %1103 = vmatmul.mubr.f32.gmra.mxu0 %v987
      %v1104 = vpop.f32.mrf.mxu0
      %v1105 = vadd.f32 0.0, %v1104
      %v1106 = vpop.f32.mrf.mxu0
      %1107 = vmatprep.mubr.f32.mxu0 0.0
      %1108 = vmatmul.mubr.f32.gmra.mxu0 %v990
      %v1109 = vpop.f32.mrf.mxu0
      %v1110 = vadd.f32 0.0, %v1109
      %v1111 = vpop.f32.mrf.mxu0
      %1112 = vmatprep.mubr.f32.mxu0 0.0
      %1113 = vmatmul.mubr.f32.gmra.mxu0 %v993
      %v1114 = vpop.f32.mrf.mxu0
      %v1115 = vadd.f32 0.0, %v1114
      %v1116 = vpop.f32.mrf.mxu0
      %1117 = vmatprep.mubr.f32.mxu0 0.0
      %1118 = vmatmul.mubr.f32.gmra.mxu0 %v996
      %v1119 = vpop.f32.mrf.mxu0
      %v1120 = vadd.f32 0.0, %v1119
      %v1121 = vpop.f32.mrf.mxu0
      %1122 = vmatprep.mubr.f32.mxu0 0.0
      %1123 = vmatmul.mubr.f32.gmra.mxu0 %v999
      %v1124 = vpop.f32.mrf.mxu0
      %v1125 = vadd.f32 0.0, %v1124
      %v1126 = vpop.f32.mrf.mxu0
      %1127 = vmatprep.mubr.f32.mxu0 0.0
      %1128 = vmatmul.mubr.f32.gmra.mxu0 %v1002
      %v1129 = vpop.f32.mrf.mxu0
      %v1130 = vadd.f32 0.0, %v1129
      %v1131 = vpop.f32.mrf.mxu0
      %1132 = vmatprep.mubr.f32.mxu0 0.0
      %1133 = vmatmul.mubr.f32.gmra.mxu0 %v1005
      %v1134 = vpop.f32.mrf.mxu0
      %v1135 = vadd.f32 0.0, %v1134
      %v1136 = vpop.f32.mrf.mxu0
      %1137 = vmatprep.mubr.f32.mxu0 0.0
      %1138 = vmatmul.mubr.f32.gmra.mxu0 %v1008
      %v1139 = vpop.f32.mrf.mxu0
      %v1140 = vadd.f32 0.0, %v1139
      %v1141 = vpop.f32.mrf.mxu0
      %1142 = vmatprep.mubr.f32.mxu0 0.0
      %1143 = vmatmul.mubr.f32.gmra.mxu0 %v1011
      %v1144 = vpop.f32.mrf.mxu0
      %v1145 = vadd.f32 0.0, %v1144
      %v1146 = vpop.f32.mrf.mxu0
      %1147 = vmatprep.mubr.f32.mxu0 0.0
      %1148 = vmatmul.mubr.f32.gmra.mxu0 %v1014
      %v1149 = vpop.f32.mrf.mxu0
      %v1150 = vadd.f32 0.0, %v1149
      %v1151 = vpop.f32.mrf.mxu0
      %1152 = vmatprep.mubr.f32.mxu0 0.0
      %1153 = vmatmul.mubr.f32.gmra.mxu0 %v1017
      %v1154 = vpop.f32.mrf.mxu0
      %v1155 = vadd.f32 0.0, %v1154
      %v1156 = vpop.f32.mrf.mxu0
      %1157 = vmatprep.mubr.f32.mxu0 0.0
      %1158 = vmatmul.mubr.f32.gmra.mxu0 %v1020
      %v1159 = vpop.f32.mrf.mxu0
      %v1160 = vadd.f32 0.0, %v1159
      %v1161 = vpop.f32.mrf.mxu0
      %1162 = vmatprep.mubr.f32.mxu0 0.0
      %1163 = vmatmul.mubr.f32.gmra.mxu0 %v1023
      %v1164 = vpop.f32.mrf.mxu0
      %v1165 = vadd.f32 0.0, %v1164
      %v1166 = vpop.f32.mrf.mxu0
      %1167 = vmatprep.mubr.f32.mxu0 0.0
      %1168 = vmatmul.mubr.f32.gmra.mxu0 %v1026
      %v1169 = vpop.f32.mrf.mxu0
      %v1170 = vadd.f32 0.0, %v1169
      %v1171 = vpop.f32.mrf.mxu0
      %1172 = vdwg.mxu0
      %vm1173 = vcmask 523264
      %v1175 = vsel %vm1173, %v920, 0
      %v1178 = vsel %vm1173, %v921, 0
      %v1181 = vsel %vm1173, %v922, 0
      %v1184 = vsel %vm1173, %v923, 0
      %v1187 = vsel %vm1173, %v924, 0
      %v1190 = vsel %vm1173, %v925, 0
      %v1193 = vsel %vm1173, %v926, 0
      %v1196 = vsel %vm1173, %v927, 0
      %v1199 = vsel %vm1173, %v928, 0
      %v1202 = vsel %vm1173, %v929, 0
      %v1205 = vsel %vm1173, %v930, 0
      %v1208 = vsel %vm1173, %v931, 0
      %v1211 = vsel %vm1173, %v932, 0
      %v1214 = vsel %vm1173, %v933, 0
      %v1217 = vsel %vm1173, %v934, 0
      %v1220 = vsel %vm1173, %v935, 0
      %1222 = vmatprep.subr.mxu0 0.0
      %1223 = vmatpush1.msra.mxu0 0.0
      %1224 = vmatprep.subr.mxu0 0.0
      %1225 = vmatpush1.msra.mxu0 0.0
      %1226 = vmatprep.subr.mxu0 0.0
      %1227 = vmatpush1.msra.mxu0 0.0
      %1228 = vmatprep.subr.mxu0 0.0
      %1229 = vmatpush1.msra.mxu0 0.0
      %1230 = vmatprep.subr.mxu0 0.0
      %1231 = vmatpush1.msra.mxu0 0.0
      %1232 = vmatprep.subr.mxu0 0.0
      %1233 = vmatpush1.msra.mxu0 0.0
      %1234 = vmatprep.subr.mxu0 0.0
      %1235 = vmatpush1.msra.mxu0 0.0
      %1236 = vmatprep.subr.mxu0 0.0
      %1237 = vmatpush1.msra.mxu0 0.0
      %1238 = vmatprep.subr.mxu0 0.0
      %1239 = vmatpush1.msra.mxu0 %v943
      %1240 = vmatprep.subr.mxu0 0.0
      %1241 = vmatpush1.msra.mxu0 %v942
      %1242 = vmatprep.subr.mxu0 0.0
      %1243 = vmatpush1.msra.mxu0 %v941
      %1244 = vmatprep.subr.mxu0 0.0
      %1245 = vmatpush1.msra.mxu0 %v940
      %1246 = vmatprep.subr.mxu0 0.0
      %1247 = vmatpush1.msra.mxu0 %v939
      %1248 = vmatprep.subr.mxu0 0.0
      %1249 = vmatpush1.msra.mxu0 %v938
      %1250 = vmatprep.subr.mxu0 0.0
      %1251 = vmatpush1.msra.mxu0 %v937
      %1252 = vmatprep.subr.mxu0 0.0
      %1253 = vmatpush1.msra.mxu0 %v936
      %1254 = vmatprep.subr.mxu0 0.0
      %1255 = vmatpush2.msra.mxu0 0.0
      %1256 = vmatprep.subr.mxu0 0.0
      %1257 = vmatpush2.msra.mxu0 0.0
      %1258 = vmatprep.subr.mxu0 0.0
      %1259 = vmatpush2.msra.mxu0 0.0
      %1260 = vmatprep.subr.mxu0 0.0
      %1261 = vmatpush2.msra.mxu0 0.0
      %1262 = vmatprep.subr.mxu0 0.0
      %1263 = vmatpush2.msra.mxu0 0.0
      %1264 = vmatprep.subr.mxu0 0.0
      %1265 = vmatpush2.msra.mxu0 0.0
      %1266 = vmatprep.subr.mxu0 0.0
      %1267 = vmatpush2.msra.mxu0 0.0
      %1268 = vmatprep.subr.mxu0 0.0
      %1269 = vmatpush2.msra.mxu0 0.0
      %1270 = vmatprep.subr.mxu0 0.0
      %1271 = vmatpush2.msra.mxu0 0.0
      %1272 = vmatprep.subr.mxu0 0.0
      %1273 = vmatpush2.msra.mxu0 0.0
      %1274 = vmatprep.subr.mxu0 0.0
      %1275 = vmatpush2.msra.mxu0 0.0
      %1276 = vmatprep.subr.mxu0 0.0
      %1277 = vmatpush2.msra.mxu0 0.0
      %1278 = vmatprep.subr.mxu0 0.0
      %1279 = vmatpush2.msra.mxu0 0.0
      %1280 = vmatprep.subr.mxu0 0.0
      %1281 = vmatpush2.msra.mxu0 0.0
      %1282 = vmatprep.subr.mxu0 0.0
      %1283 = vmatpush2.msra.mxu0 0.0
      %1284 = vmatprep.subr.mxu0 0.0
      %1285 = vmatpush2.msra.mxu0 0.0
      %1286 = vmatprep.mubr.f32.mxu0 0.0
      %1287 = vmatmul.mubr.f32.gmra.mxu0 %v1175
      %v1288 = vpop.f32.mrf.mxu0
      %v1289 = vadd.f32 %v1095, %v1288
      %v1290 = vpop.f32.mrf.mxu0
      %1291 = vmatprep.mubr.f32.mxu0 0.0
      %1292 = vmatmul.mubr.f32.gmra.mxu0 %v1178
      %v1293 = vpop.f32.mrf.mxu0
      %v1294 = vadd.f32 %v1100, %v1293
      %v1295 = vpop.f32.mrf.mxu0
      %1296 = vmatprep.mubr.f32.mxu0 0.0
      %1297 = vmatmul.mubr.f32.gmra.mxu0 %v1181
      %v1298 = vpop.f32.mrf.mxu0
      %v1299 = vadd.f32 %v1105, %v1298
      %v1300 = vpop.f32.mrf.mxu0
      %1301 = vmatprep.mubr.f32.mxu0 0.0
      %1302 = vmatmul.mubr.f32.gmra.mxu0 %v1184
      %v1303 = vpop.f32.mrf.mxu0
      %v1304 = vadd.f32 %v1110, %v1303
      %v1305 = vpop.f32.mrf.mxu0
      %1306 = vmatprep.mubr.f32.mxu0 0.0
      %1307 = vmatmul.mubr.f32.gmra.mxu0 %v1187
      %v1308 = vpop.f32.mrf.mxu0
      %v1309 = vadd.f32 %v1115, %v1308
      %v1310 = vpop.f32.mrf.mxu0
      %1311 = vmatprep.mubr.f32.mxu0 0.0
      %1312 = vmatmul.mubr.f32.gmra.mxu0 %v1190
      %v1313 = vpop.f32.mrf.mxu0
      %v1314 = vadd.f32 %v1120, %v1313
      %v1315 = vpop.f32.mrf.mxu0
      %1316 = vmatprep.mubr.f32.mxu0 0.0
      %1317 = vmatmul.mubr.f32.gmra.mxu0 %v1193
      %v1318 = vpop.f32.mrf.mxu0
      %v1319 = vadd.f32 %v1125, %v1318
      %v1320 = vpop.f32.mrf.mxu0
      %1321 = vmatprep.mubr.f32.mxu0 0.0
      %1322 = vmatmul.mubr.f32.gmra.mxu0 %v1196
      %v1323 = vpop.f32.mrf.mxu0
      %v1324 = vadd.f32 %v1130, %v1323
      %v1325 = vpop.f32.mrf.mxu0
      %1326 = vmatprep.mubr.f32.mxu0 0.0
      %1327 = vmatmul.mubr.f32.gmra.mxu0 %v1199
      %v1328 = vpop.f32.mrf.mxu0
      %v1329 = vadd.f32 %v1135, %v1328
      %v1330 = vpop.f32.mrf.mxu0
      %1331 = vmatprep.mubr.f32.mxu0 0.0
      %1332 = vmatmul.mubr.f32.gmra.mxu0 %v1202
      %v1333 = vpop.f32.mrf.mxu0
      %v1334 = vadd.f32 %v1140, %v1333
      %v1335 = vpop.f32.mrf.mxu0
      %1336 = vmatprep.mubr.f32.mxu0 0.0
      %1337 = vmatmul.mubr.f32.gmra.mxu0 %v1205
      %v1338 = vpop.f32.mrf.mxu0
      %v1339 = vadd.f32 %v1145, %v1338
      %v1340 = vpop.f32.mrf.mxu0
      %1341 = vmatprep.mubr.f32.mxu0 0.0
      %1342 = vmatmul.mubr.f32.gmra.mxu0 %v1208
      %v1343 = vpop.f32.mrf.mxu0
      %v1344 = vadd.f32 %v1150, %v1343
      %v1345 = vpop.f32.mrf.mxu0
      %1346 = vmatprep.mubr.f32.mxu0 0.0
      %1347 = vmatmul.mubr.f32.gmra.mxu0 %v1211
      %v1348 = vpop.f32.mrf.mxu0
      %v1349 = vadd.f32 %v1155, %v1348
      %v1350 = vpop.f32.mrf.mxu0
      %1351 = vmatprep.mubr.f32.mxu0 0.0
      %1352 = vmatmul.mubr.f32.gmra.mxu0 %v1214
      %v1353 = vpop.f32.mrf.mxu0
      %v1354 = vadd.f32 %v1160, %v1353
      %v1355 = vpop.f32.mrf.mxu0
      %1356 = vmatprep.mubr.f32.mxu0 0.0
      %1357 = vmatmul.mubr.f32.gmra.mxu0 %v1217
      %v1358 = vpop.f32.mrf.mxu0
      %v1359 = vadd.f32 %v1165, %v1358
      %v1360 = vpop.f32.mrf.mxu0
      %1361 = vmatprep.mubr.f32.mxu0 0.0
      %1362 = vmatmul.mubr.f32.gmra.mxu0 %v1220
      %v1363 = vpop.f32.mrf.mxu0
      %v1364 = vadd.f32 %v1170, %v1363
      %v1365 = vpop.f32.mrf.mxu0
      %1366 = vdwg.mxu0
      %v1367 = vld [vmem:[%s9] sm:$0xff]
      %v1368 = vld [vmem:[%s9 + $0x8] sm:$0xff]
      %v1369 = vld [vmem:[%s9 + $0x10] sm:$0xff]
      %v1370 = vld [vmem:[%s9 + $0x18] sm:$0xff]
      %v1371 = vld [vmem:[%s9 + $0x20] sm:$0xff]
      %v1372 = vld [vmem:[%s9 + $0x28] sm:$0xff]
      %v1373 = vld [vmem:[%s9 + $0x30] sm:$0xff]
      %v1374 = vld [vmem:[%s9 + $0x38] sm:$0xff]
      %v1375 = vld [vmem:[%s9 + $0x40] sm:$0xff]
      %v1376 = vld [vmem:[%s9 + $0x48] sm:$0xff]
      %v1377 = vld [vmem:[%s9 + $0x50] sm:$0xff]
      %v1378 = vld [vmem:[%s9 + $0x58] sm:$0xff]
      %v1379 = vld [vmem:[%s9 + $0x60] sm:$0xff]
      %v1380 = vld [vmem:[%s9 + $0x68] sm:$0xff]
      %v1381 = vld [vmem:[%s9 + $0x70] sm:$0xff]
      %v1382 = vld [vmem:[%s9 + $0x78] sm:$0xff]
      %1383 = vmatprep.subr.mxu0 0.0
      %1384 = vmatpush1.msra.mxu0 %v1364
      %1385 = vmatprep.subr.mxu0 0.0
      %1386 = vmatpush1.msra.mxu0 %v1359
      %1387 = vmatprep.subr.mxu0 0.0
      %1388 = vmatpush1.msra.mxu0 %v1354
      %1389 = vmatprep.subr.mxu0 0.0
      %1390 = vmatpush1.msra.mxu0 %v1349
      %1391 = vmatprep.subr.mxu0 0.0
      %1392 = vmatpush1.msra.mxu0 %v1344
      %1393 = vmatprep.subr.mxu0 0.0
      %1394 = vmatpush1.msra.mxu0 %v1339
      %1395 = vmatprep.subr.mxu0 0.0
      %1396 = vmatpush1.msra.mxu0 %v1334
      %1397 = vmatprep.subr.mxu0 0.0
      %1398 = vmatpush1.msra.mxu0 %v1329
      %1399 = vmatprep.subr.mxu0 0.0
      %1400 = vmatpush1.msra.mxu0 %v1324
      %1401 = vmatprep.subr.mxu0 0.0
      %1402 = vmatpush1.msra.mxu0 %v1319
      %1403 = vmatprep.subr.mxu0 0.0
      %1404 = vmatpush1.msra.mxu0 %v1314
      %1405 = vmatprep.subr.mxu0 0.0
      %1406 = vmatpush1.msra.mxu0 %v1309
      %1407 = vmatprep.subr.mxu0 0.0
      %1408 = vmatpush1.msra.mxu0 %v1304
      %1409 = vmatprep.subr.mxu0 0.0
      %1410 = vmatpush1.msra.mxu0 %v1299
      %1411 = vmatprep.subr.mxu0 0.0
      %1412 = vmatpush1.msra.mxu0 %v1294
      %1413 = vmatprep.subr.mxu0 0.0
      %1414 = vmatpush1.msra.mxu0 %v1289
      %1415 = vmatprep.subr.mxu0 0.0
      %1416 = vmatpush2.msra.mxu0 0.0
      %1417 = vmatprep.subr.mxu0 0.0
      %1418 = vmatpush2.msra.mxu0 0.0
      %1419 = vmatprep.subr.mxu0 0.0
      %1420 = vmatpush2.msra.mxu0 0.0
      %1421 = vmatprep.subr.mxu0 0.0
      %1422 = vmatpush2.msra.mxu0 0.0
      %1423 = vmatprep.subr.mxu0 0.0
      %1424 = vmatpush2.msra.mxu0 0.0
      %1425 = vmatprep.subr.mxu0 0.0
      %1426 = vmatpush2.msra.mxu0 0.0
      %1427 = vmatprep.subr.mxu0 0.0
      %1428 = vmatpush2.msra.mxu0 0.0
      %1429 = vmatprep.subr.mxu0 0.0
      %1430 = vmatpush2.msra.mxu0 0.0
      %1431 = vmatprep.subr.mxu0 0.0
      %1432 = vmatpush2.msra.mxu0 0.0
      %1433 = vmatprep.subr.mxu0 0.0
      %1434 = vmatpush2.msra.mxu0 0.0
      %1435 = vmatprep.subr.mxu0 0.0
      %1436 = vmatpush2.msra.mxu0 0.0
      %1437 = vmatprep.subr.mxu0 0.0
      %1438 = vmatpush2.msra.mxu0 0.0
      %1439 = vmatprep.subr.mxu0 0.0
      %1440 = vmatpush2.msra.mxu0 0.0
      %1441 = vmatprep.subr.mxu0 0.0
      %1442 = vmatpush2.msra.mxu0 0.0
      %1443 = vmatprep.subr.mxu0 0.0
      %1444 = vmatpush2.msra.mxu0 0.0
      %1445 = vmatprep.subr.mxu0 0.0
      %1446 = vmatpush2.msra.mxu0 0.0
      %1447 = vmatprep.mubr.f32.mxu0 0.0
      %1448 = vmatmul.mubr.f32.gmra.mxu0 %v529
      %v1449 = vpop.f32.mrf.mxu0
      %v1450 = vadd.f32 %v1367, %v1449
      %v1451 = vpop.f32.mrf.mxu0
      %1452 = vmatprep.mubr.f32.mxu0 0.0
      %1453 = vmatmul.mubr.f32.gmra.mxu0 %v530
      %v1454 = vpop.f32.mrf.mxu0
      %v1455 = vadd.f32 %v1368, %v1454
      %v1456 = vpop.f32.mrf.mxu0
      %1457 = vmatprep.mubr.f32.mxu0 0.0
      %1458 = vmatmul.mubr.f32.gmra.mxu0 %v531
      %v1459 = vpop.f32.mrf.mxu0
      %v1460 = vadd.f32 %v1369, %v1459
      %v1461 = vpop.f32.mrf.mxu0
      %1462 = vmatprep.mubr.f32.mxu0 0.0
      %1463 = vmatmul.mubr.f32.gmra.mxu0 %v532
      %v1464 = vpop.f32.mrf.mxu0
      %v1465 = vadd.f32 %v1370, %v1464
      %v1466 = vpop.f32.mrf.mxu0
      %1467 = vmatprep.mubr.f32.mxu0 0.0
      %1468 = vmatmul.mubr.f32.gmra.mxu0 %v533
      %v1469 = vpop.f32.mrf.mxu0
      %v1470 = vadd.f32 %v1371, %v1469
      %v1471 = vpop.f32.mrf.mxu0
      %1472 = vmatprep.mubr.f32.mxu0 0.0
      %1473 = vmatmul.mubr.f32.gmra.mxu0 %v534
      %v1474 = vpop.f32.mrf.mxu0
      %v1475 = vadd.f32 %v1372, %v1474
      %v1476 = vpop.f32.mrf.mxu0
      %1477 = vmatprep.mubr.f32.mxu0 0.0
      %1478 = vmatmul.mubr.f32.gmra.mxu0 %v535
      %v1479 = vpop.f32.mrf.mxu0
      %v1480 = vadd.f32 %v1373, %v1479
      %v1481 = vpop.f32.mrf.mxu0
      %1482 = vmatprep.mubr.f32.mxu0 0.0
      %1483 = vmatmul.mubr.f32.gmra.mxu0 %v536
      %v1484 = vpop.f32.mrf.mxu0
      %v1485 = vadd.f32 %v1374, %v1484
      %v1486 = vpop.f32.mrf.mxu0
      %1487 = vmatprep.mubr.f32.mxu0 0.0
      %1488 = vmatmul.mubr.f32.gmra.mxu0 %v537
      %v1489 = vpop.f32.mrf.mxu0
      %v1490 = vadd.f32 %v1375, %v1489
      %v1491 = vpop.f32.mrf.mxu0
      %1492 = vmatprep.mubr.f32.mxu0 0.0
      %1493 = vmatmul.mubr.f32.gmra.mxu0 %v538
      %v1494 = vpop.f32.mrf.mxu0
      %v1495 = vadd.f32 %v1376, %v1494
      %v1496 = vpop.f32.mrf.mxu0
      %1497 = vmatprep.mubr.f32.mxu0 0.0
      %1498 = vmatmul.mubr.f32.gmra.mxu0 %v539
      %v1499 = vpop.f32.mrf.mxu0
      %v1500 = vadd.f32 %v1377, %v1499
      %v1501 = vpop.f32.mrf.mxu0
      %1502 = vmatprep.mubr.f32.mxu0 0.0
      %1503 = vmatmul.mubr.f32.gmra.mxu0 %v540
      %v1504 = vpop.f32.mrf.mxu0
      %v1505 = vadd.f32 %v1378, %v1504
      %v1506 = vpop.f32.mrf.mxu0
      %1507 = vmatprep.mubr.f32.mxu0 0.0
      %1508 = vmatmul.mubr.f32.gmra.mxu0 %v541
      %v1509 = vpop.f32.mrf.mxu0
      %v1510 = vadd.f32 %v1379, %v1509
      %v1511 = vpop.f32.mrf.mxu0
      %1512 = vmatprep.mubr.f32.mxu0 0.0
      %1513 = vmatmul.mubr.f32.gmra.mxu0 %v542
      %v1514 = vpop.f32.mrf.mxu0
      %v1515 = vadd.f32 %v1380, %v1514
      %v1516 = vpop.f32.mrf.mxu0
      %1517 = vmatprep.mubr.f32.mxu0 0.0
      %1518 = vmatmul.mubr.f32.gmra.mxu0 %v543
      %v1519 = vpop.f32.mrf.mxu0
      %v1520 = vadd.f32 %v1381, %v1519
      %v1521 = vpop.f32.mrf.mxu0
      %1522 = vmatprep.mubr.f32.mxu0 0.0
      %1523 = vmatmul.mubr.f32.gmra.mxu0 %v544
      %v1524 = vpop.f32.mrf.mxu0
      %v1525 = vadd.f32 %v1382, %v1524
      %v1526 = vpop.f32.mrf.mxu0
      %1527 = vdwg.mxu0
      %v1528 = vmax.f32 %v1450, 0.0
      %v1529 = vmax.f32 %v1455, 0.0
      %v1530 = vmax.f32 %v1460, 0.0
      %v1531 = vmax.f32 %v1465, 0.0
      %v1532 = vmax.f32 %v1470, 0.0
      %v1533 = vmax.f32 %v1475, 0.0
      %v1534 = vmax.f32 %v1480, 0.0
      %v1535 = vmax.f32 %v1485, 0.0
      %v1536 = vmax.f32 %v1490, 0.0
      %v1537 = vmax.f32 %v1495, 0.0
      %v1538 = vmax.f32 %v1500, 0.0
      %v1539 = vmax.f32 %v1505, 0.0
      %v1540 = vmax.f32 %v1510, 0.0
      %v1541 = vmax.f32 %v1515, 0.0
      %v1542 = vmax.f32 %v1520, 0.0
      %v1543 = vmax.f32 %v1525, 0.0
      %v1544 = vld [vmem:[%s517] sm:$0xff]
      %v1545 = vld [vmem:[%s517 + $0x8] sm:$0xff]
      %1546 = vmatprep.subr.mxu0 0.0
      %1547 = vmatpush1.msra.mxu0 %v1543
      %1548 = vmatprep.subr.mxu0 0.0
      %1549 = vmatpush1.msra.mxu0 %v1542
      %1550 = vmatprep.subr.mxu0 0.0
      %1551 = vmatpush1.msra.mxu0 %v1541
      %1552 = vmatprep.subr.mxu0 0.0
      %1553 = vmatpush1.msra.mxu0 %v1540
      %1554 = vmatprep.subr.mxu0 0.0
      %1555 = vmatpush1.msra.mxu0 %v1539
      %1556 = vmatprep.subr.mxu0 0.0
      %1557 = vmatpush1.msra.mxu0 %v1538
      %1558 = vmatprep.subr.mxu0 0.0
      %1559 = vmatpush1.msra.mxu0 %v1537
      %1560 = vmatprep.subr.mxu0 0.0
      %1561 = vmatpush1.msra.mxu0 %v1536
      %1562 = vmatprep.subr.mxu0 0.0
      %1563 = vmatpush1.msra.mxu0 %v1535
      %1564 = vmatprep.subr.mxu0 0.0
      %1565 = vmatpush1.msra.mxu0 %v1534
      %1566 = vmatprep.subr.mxu0 0.0
      %1567 = vmatpush1.msra.mxu0 %v1533
      %1568 = vmatprep.subr.mxu0 0.0
      %1569 = vmatpush1.msra.mxu0 %v1532
      %1570 = vmatprep.subr.mxu0 0.0
      %1571 = vmatpush1.msra.mxu0 %v1531
      %1572 = vmatprep.subr.mxu0 0.0
      %1573 = vmatpush1.msra.mxu0 %v1530
      %1574 = vmatprep.subr.mxu0 0.0
      %1575 = vmatpush1.msra.mxu0 %v1529
      %1576 = vmatprep.subr.mxu0 0.0
      %1577 = vmatpush1.msra.mxu0 %v1528
      %1578 = vmatprep.subr.mxu0 0.0
      %1579 = vmatpush2.msra.mxu0 0.0
      %1580 = vmatprep.subr.mxu0 0.0
      %1581 = vmatpush2.msra.mxu0 0.0
      %1582 = vmatprep.subr.mxu0 0.0
      %1583 = vmatpush2.msra.mxu0 0.0
      %1584 = vmatprep.subr.mxu0 0.0
      %1585 = vmatpush2.msra.mxu0 0.0
      %1586 = vmatprep.subr.mxu0 0.0
      %1587 = vmatpush2.msra.mxu0 0.0
      %1588 = vmatprep.subr.mxu0 0.0
      %1589 = vmatpush2.msra.mxu0 0.0
      %1590 = vmatprep.subr.mxu0 0.0
      %1591 = vmatpush2.msra.mxu0 0.0
      %1592 = vmatprep.subr.mxu0 0.0
      %1593 = vmatpush2.msra.mxu0 0.0
      %1594 = vmatprep.subr.mxu0 0.0
      %1595 = vmatpush2.msra.mxu0 0.0
      %1596 = vmatprep.subr.mxu0 0.0
      %1597 = vmatpush2.msra.mxu0 0.0
      %1598 = vmatprep.subr.mxu0 0.0
      %1599 = vmatpush2.msra.mxu0 0.0
      %1600 = vmatprep.subr.mxu0 0.0
      %1601 = vmatpush2.msra.mxu0 0.0
      %1602 = vmatprep.subr.mxu0 0.0
      %1603 = vmatpush2.msra.mxu0 0.0
      %1604 = vmatprep.subr.mxu0 0.0
      %1605 = vmatpush2.msra.mxu0 0.0
      %1606 = vmatprep.subr.mxu0 0.0
      %1607 = vmatpush2.msra.mxu0 0.0
      %1608 = vmatprep.subr.mxu0 0.0
      %1609 = vmatpush2.msra.mxu0 0.0
      %1610 = vmatprep.mubr.f32.mxu0 0.0
      %1611 = vmatmul.mubr.f32.gmra.mxu0 %v1544
      %v1612 = vpop.f32.mrf.mxu0
      %v1613 = vadd.f32 0.0, %v1612
      %v1614 = vpop.f32.mrf.mxu0
      %1615 = vmatprep.mubr.f32.mxu0 0.0
      %1616 = vmatmul.mubr.f32.gmra.mxu0 %v1545
      %v1617 = vpop.f32.mrf.mxu0
      %v1618 = vadd.f32 0.0, %v1617
      %v1619 = vpop.f32.mrf.mxu0
      %1620 = vdwg.mxu0
      %v1621 = vld [vmem:[%s523] sm:$0xff]
      %v1622 = vld [vmem:[%s523 + $0x8] sm:$0xff]
      %1623 = vmatprep.subr.mxu0 0.0
      %1624 = vmatpush1.msra.mxu0 %v917
      %1625 = vmatprep.subr.mxu0 0.0
      %1626 = vmatpush1.msra.mxu0 %v912
      %1627 = vmatprep.subr.mxu0 0.0
      %1628 = vmatpush1.msra.mxu0 %v907
      %1629 = vmatprep.subr.mxu0 0.0
      %1630 = vmatpush1.msra.mxu0 %v902
      %1631 = vmatprep.subr.mxu0 0.0
      %1632 = vmatpush1.msra.mxu0 %v897
      %1633 = vmatprep.subr.mxu0 0.0
      %1634 = vmatpush1.msra.mxu0 %v892
      %1635 = vmatprep.subr.mxu0 0.0
      %1636 = vmatpush1.msra.mxu0 %v887
      %1637 = vmatprep.subr.mxu0 0.0
      %1638 = vmatpush1.msra.mxu0 %v882
      %1639 = vmatprep.subr.mxu0 0.0
      %1640 = vmatpush1.msra.mxu0 %v877
      %1641 = vmatprep.subr.mxu0 0.0
      %1642 = vmatpush1.msra.mxu0 %v872
      %1643 = vmatprep.subr.mxu0 0.0
      %1644 = vmatpush1.msra.mxu0 %v867
      %1645 = vmatprep.subr.mxu0 0.0
      %1646 = vmatpush1.msra.mxu0 %v862
      %1647 = vmatprep.subr.mxu0 0.0
      %1648 = vmatpush1.msra.mxu0 %v857
      %1649 = vmatprep.subr.mxu0 0.0
      %1650 = vmatpush1.msra.mxu0 %v852
      %1651 = vmatprep.subr.mxu0 0.0
      %1652 = vmatpush1.msra.mxu0 %v847
      %1653 = vmatprep.subr.mxu0 0.0
      %1654 = vmatpush1.msra.mxu0 %v842
      %1655 = vmatprep.subr.mxu0 0.0
      %1656 = vmatpush2.msra.mxu0 0.0
      %1657 = vmatprep.subr.mxu0 0.0
      %1658 = vmatpush2.msra.mxu0 0.0
      %1659 = vmatprep.subr.mxu0 0.0
      %1660 = vmatpush2.msra.mxu0 0.0
      %1661 = vmatprep.subr.mxu0 0.0
      %1662 = vmatpush2.msra.mxu0 0.0
      %1663 = vmatprep.subr.mxu0 0.0
      %1664 = vmatpush2.msra.mxu0 0.0
      %1665 = vmatprep.subr.mxu0 0.0
      %1666 = vmatpush2.msra.mxu0 0.0
      %1667 = vmatprep.subr.mxu0 0.0
      %1668 = vmatpush2.msra.mxu0 0.0
      %1669 = vmatprep.subr.mxu0 0.0
      %1670 = vmatpush2.msra.mxu0 0.0
      %1671 = vmatprep.subr.mxu0 0.0
      %1672 = vmatpush2.msra.mxu0 0.0
      %1673 = vmatprep.subr.mxu0 0.0
      %1674 = vmatpush2.msra.mxu0 0.0
      %1675 = vmatprep.subr.mxu0 0.0
      %1676 = vmatpush2.msra.mxu0 0.0
      %1677 = vmatprep.subr.mxu0 0.0
      %1678 = vmatpush2.msra.mxu0 0.0
      %1679 = vmatprep.subr.mxu0 0.0
      %1680 = vmatpush2.msra.mxu0 0.0
      %1681 = vmatprep.subr.mxu0 0.0
      %1682 = vmatpush2.msra.mxu0 0.0
      %1683 = vmatprep.subr.mxu0 0.0
      %1684 = vmatpush2.msra.mxu0 0.0
      %1685 = vmatprep.subr.mxu0 0.0
      %1686 = vmatpush2.msra.mxu0 0.0
      %1687 = vmatprep.mubr.f32.mxu0 0.0
      %1688 = vmatmul.mubr.f32.gmra.mxu0 %v1621
      %v1689 = vpop.f32.mrf.mxu0
      %v1690 = vadd.f32 0.0, %v1689
      %v1691 = vpop.f32.mrf.mxu0
      %1692 = vmatprep.mubr.f32.mxu0 0.0
      %1693 = vmatmul.mubr.f32.gmra.mxu0 %v1622
      %v1694 = vpop.f32.mrf.mxu0
      %v1695 = vadd.f32 0.0, %v1694
      %v1696 = vpop.f32.mrf.mxu0
      %1697 = vdwg.mxu0
      %v1698 = vld [vmem:[%s10] sm:$0xff]
      %v1699 = vld [vmem:[%s10 + $0x8] sm:$0xff]
      %v1700 = vld [vmem:[%s10 + $0x10] sm:$0xff]
      %v1701 = vld [vmem:[%s10 + $0x18] sm:$0xff]
      %v1702 = vld [vmem:[%s10 + $0x20] sm:$0xff]
      %v1703 = vld [vmem:[%s10 + $0x28] sm:$0xff]
      %v1704 = vld [vmem:[%s10 + $0x30] sm:$0xff]
      %v1705 = vld [vmem:[%s10 + $0x38] sm:$0xff]
      %v1707 = vsel %vm1173, %v1613, 0
      %v1710 = vsel %vm1173, %v1618, 0
      %1712 = vmatprep.subr.mxu0 0.0
      %1713 = vmatpush1.msra.mxu0 0.0
      %1714 = vmatprep.subr.mxu0 0.0
      %1715 = vmatpush1.msra.mxu0 0.0
      %1716 = vmatprep.subr.mxu0 0.0
      %1717 = vmatpush1.msra.mxu0 0.0
      %1718 = vmatprep.subr.mxu0 0.0
      %1719 = vmatpush1.msra.mxu0 0.0
      %1720 = vmatprep.subr.mxu0 0.0
      %1721 = vmatpush1.msra.mxu0 0.0
      %1722 = vmatprep.subr.mxu0 0.0
      %1723 = vmatpush1.msra.mxu0 0.0
      %1724 = vmatprep.subr.mxu0 0.0
      %1725 = vmatpush1.msra.mxu0 0.0
      %1726 = vmatprep.subr.mxu0 0.0
      %1727 = vmatpush1.msra.mxu0 0.0
      %1728 = vmatprep.subr.mxu0 0.0
      %1729 = vmatpush1.msra.mxu0 %v1705
      %1730 = vmatprep.subr.mxu0 0.0
      %1731 = vmatpush1.msra.mxu0 %v1704
      %1732 = vmatprep.subr.mxu0 0.0
      %1733 = vmatpush1.msra.mxu0 %v1703
      %1734 = vmatprep.subr.mxu0 0.0
      %1735 = vmatpush1.msra.mxu0 %v1702
      %1736 = vmatprep.subr.mxu0 0.0
      %1737 = vmatpush1.msra.mxu0 %v1701
      %1738 = vmatprep.subr.mxu0 0.0
      %1739 = vmatpush1.msra.mxu0 %v1700
      %1740 = vmatprep.subr.mxu0 0.0
      %1741 = vmatpush1.msra.mxu0 %v1699
      %1742 = vmatprep.subr.mxu0 0.0
      %1743 = vmatpush1.msra.mxu0 %v1698
      %1744 = vmatprep.subr.mxu0 0.0
      %1745 = vmatpush2.msra.mxu0 0.0
      %1746 = vmatprep.subr.mxu0 0.0
      %1747 = vmatpush2.msra.mxu0 0.0
      %1748 = vmatprep.subr.mxu0 0.0
      %1749 = vmatpush2.msra.mxu0 0.0
      %1750 = vmatprep.subr.mxu0 0.0
      %1751 = vmatpush2.msra.mxu0 0.0
      %1752 = vmatprep.subr.mxu0 0.0
      %1753 = vmatpush2.msra.mxu0 0.0
      %1754 = vmatprep.subr.mxu0 0.0
      %1755 = vmatpush2.msra.mxu0 0.0
      %1756 = vmatprep.subr.mxu0 0.0
      %1757 = vmatpush2.msra.mxu0 0.0
      %1758 = vmatprep.subr.mxu0 0.0
      %1759 = vmatpush2.msra.mxu0 0.0
      %1760 = vmatprep.subr.mxu0 0.0
      %1761 = vmatpush2.msra.mxu0 0.0
      %1762 = vmatprep.subr.mxu0 0.0
      %1763 = vmatpush2.msra.mxu0 0.0
      %1764 = vmatprep.subr.mxu0 0.0
      %1765 = vmatpush2.msra.mxu0 0.0
      %1766 = vmatprep.subr.mxu0 0.0
      %1767 = vmatpush2.msra.mxu0 0.0
      %1768 = vmatprep.subr.mxu0 0.0
      %1769 = vmatpush2.msra.mxu0 0.0
      %1770 = vmatprep.subr.mxu0 0.0
      %1771 = vmatpush2.msra.mxu0 0.0
      %1772 = vmatprep.subr.mxu0 0.0
      %1773 = vmatpush2.msra.mxu0 0.0
      %1774 = vmatprep.subr.mxu0 0.0
      %1775 = vmatpush2.msra.mxu0 0.0
      %1776 = vmatprep.mubr.f32.mxu0 0.0
      %1777 = vmatmul.mubr.f32.gmra.mxu0 %v1707
      %v1778 = vpop.f32.mrf.mxu0
      %v1779 = vadd.f32 0.0, %v1778
      %v1780 = vpop.f32.mrf.mxu0
      %1781 = vmatprep.mubr.f32.mxu0 0.0
      %1782 = vmatmul.mubr.f32.gmra.mxu0 %v1710
      %v1783 = vpop.f32.mrf.mxu0
      %v1784 = vadd.f32 0.0, %v1783
      %v1785 = vpop.f32.mrf.mxu0
      %1786 = vdwg.mxu0
      %v1787 = vld [vmem:[%s11] sm:$0xff]
      %v1788 = vld [vmem:[%s11 + $0x8] sm:$0xff]
      %v1789 = vld [vmem:[%s11 + $0x10] sm:$0xff]
      %v1790 = vld [vmem:[%s11 + $0x18] sm:$0xff]
      %v1791 = vld [vmem:[%s11 + $0x20] sm:$0xff]
      %v1792 = vld [vmem:[%s11 + $0x28] sm:$0xff]
      %v1793 = vld [vmem:[%s11 + $0x30] sm:$0xff]
      %v1794 = vld [vmem:[%s11 + $0x38] sm:$0xff]
      %v1796 = vsel %vm1173, %v1690, 0
      %v1799 = vsel %vm1173, %v1695, 0
      %1801 = vmatprep.subr.mxu0 0.0
      %1802 = vmatpush1.msra.mxu0 0.0
      %1803 = vmatprep.subr.mxu0 0.0
      %1804 = vmatpush1.msra.mxu0 0.0
      %1805 = vmatprep.subr.mxu0 0.0
      %1806 = vmatpush1.msra.mxu0 0.0
      %1807 = vmatprep.subr.mxu0 0.0
      %1808 = vmatpush1.msra.mxu0 0.0
      %1809 = vmatprep.subr.mxu0 0.0
      %1810 = vmatpush1.msra.mxu0 0.0
      %1811 = vmatprep.subr.mxu0 0.0
      %1812 = vmatpush1.msra.mxu0 0.0
      %1813 = vmatprep.subr.mxu0 0.0
      %1814 = vmatpush1.msra.mxu0 0.0
      %1815 = vmatprep.subr.mxu0 0.0
      %1816 = vmatpush1.msra.mxu0 0.0
      %1817 = vmatprep.subr.mxu0 0.0
      %1818 = vmatpush1.msra.mxu0 %v1794
      %1819 = vmatprep.subr.mxu0 0.0
      %1820 = vmatpush1.msra.mxu0 %v1793
      %1821 = vmatprep.subr.mxu0 0.0
      %1822 = vmatpush1.msra.mxu0 %v1792
      %1823 = vmatprep.subr.mxu0 0.0
      %1824 = vmatpush1.msra.mxu0 %v1791
      %1825 = vmatprep.subr.mxu0 0.0
      %1826 = vmatpush1.msra.mxu0 %v1790
      %1827 = vmatprep.subr.mxu0 0.0
      %1828 = vmatpush1.msra.mxu0 %v1789
      %1829 = vmatprep.subr.mxu0 0.0
      %1830 = vmatpush1.msra.mxu0 %v1788
      %1831 = vmatprep.subr.mxu0 0.0
      %1832 = vmatpush1.msra.mxu0 %v1787
      %1833 = vmatprep.subr.mxu0 0.0
      %1834 = vmatpush2.msra.mxu0 0.0
      %1835 = vmatprep.subr.mxu0 0.0
      %1836 = vmatpush2.msra.mxu0 0.0
      %1837 = vmatprep.subr.mxu0 0.0
      %1838 = vmatpush2.msra.mxu0 0.0
      %1839 = vmatprep.subr.mxu0 0.0
      %1840 = vmatpush2.msra.mxu0 0.0
      %1841 = vmatprep.subr.mxu0 0.0
      %1842 = vmatpush2.msra.mxu0 0.0
      %1843 = vmatprep.subr.mxu0 0.0
      %1844 = vmatpush2.msra.mxu0 0.0
      %1845 = vmatprep.subr.mxu0 0.0
      %1846 = vmatpush2.msra.mxu0 0.0
      %1847 = vmatprep.subr.mxu0 0.0
      %1848 = vmatpush2.msra.mxu0 0.0
      %1849 = vmatprep.subr.mxu0 0.0
      %1850 = vmatpush2.msra.mxu0 0.0
      %1851 = vmatprep.subr.mxu0 0.0
      %1852 = vmatpush2.msra.mxu0 0.0
      %1853 = vmatprep.subr.mxu0 0.0
      %1854 = vmatpush2.msra.mxu0 0.0
      %1855 = vmatprep.subr.mxu0 0.0
      %1856 = vmatpush2.msra.mxu0 0.0
      %1857 = vmatprep.subr.mxu0 0.0
      %1858 = vmatpush2.msra.mxu0 0.0
      %1859 = vmatprep.subr.mxu0 0.0
      %1860 = vmatpush2.msra.mxu0 0.0
      %1861 = vmatprep.subr.mxu0 0.0
      %1862 = vmatpush2.msra.mxu0 0.0
      %1863 = vmatprep.subr.mxu0 0.0
      %1864 = vmatpush2.msra.mxu0 0.0
      %1865 = vmatprep.mubr.f32.mxu0 0.0
      %1866 = vmatmul.mubr.f32.gmra.mxu0 %v1796
      %v1867 = vpop.f32.mrf.mxu0
      %v1868 = vadd.f32 0.0, %v1867
      %v1869 = vpop.f32.mrf.mxu0
      %1870 = vmatprep.mubr.f32.mxu0 0.0
      %1871 = vmatmul.mubr.f32.gmra.mxu0 %v1799
      %v1872 = vpop.f32.mrf.mxu0
      %v1873 = vadd.f32 0.0, %v1872
      %v1874 = vpop.f32.mrf.mxu0
      %1875 = vdwg.mxu0
      %v1876 = vadd.f32 %v1779, %v1784
      %v1877 = vadd.f32 %v1876, %v1868
      %v1878 = vadd.f32 %v1877, %v1873
      %v1879 = vld [vmem:[%s12] sm:$0x1]
      %v1881 = vlaneseq
      %v1882 = vshrl.u32 %v1881, 7
      %v1883 = vsub.s32 0, %v1882
      %v1884 = vrot.slane %v1879, %v1883
      %v1886 = vadd.f32 %v1878, %v1884
      %vm1887 = vcmask 31744
      %v1888 = vsel %vm1887, %v1886, -inf
      %1889 = vmax.xlane.f32.xlu0 %v1888
      %v1890 = vpop.xlane.xlu0 %1889
      %v1891 = vsub.f32 %v1886, %v1890
      %v1892 = vmul.f32 %v1891, 1.442695
      %v1893 = vpow.pop %v1892
      %v1894 = vsel %vm1887, %v1893, 0.0
      %1895 = vadd.xlane.f32.xlu0 %v1894
      %v1896 = vpop.xlane.xlu0 %1895
      %v1897 = vlog2.pop %v1896
      %v1898 = vmul.f32 %v1897, 0.6931472
      %v1899 = vadd.f32 %v1898, %v1890
      %v1900 = vsub.f32 %v1886, %v1899
      %1901 = vst.msk [vmem:[%s528] sm:$0xff] %vm1887, %v1900
      %p1902 = scmp.lt.s32.totalorder %s24, 7
      %s1903 = scalar_select %p1902, %s24, 7
      %s1904 = smul.addr %s1903, 8
      %s1905 = scalar_lea.vmem %s13, %s1904
      // Predicated region
      $region73: #{tpu_custom_call.1} parent=71 // pred_check
        %p1906 = pneg %p340
      $region74: #{tpu_custom_call.1} parent=71 // pred_check_branch
        %1908 = sbr.rel (%p1906) target = $region76
      $region75: #{tpu_custom_call.1} parent=71 // pred_region
        _
      $region76: #{tpu_custom_call.1} parent=71 // pred_fallthru
        _
    $region72: #{tpu_custom_call.1} parent=5 // pred_fallthru
      _
    %p1909 = scmp.le.s32.totalorder 2, %s19
    // Predicated region
    $region77: #{tpu_custom_call.1} parent=5 // pred_check
      %p1910 = pneg %p1909
    $region78: #{tpu_custom_call.1} parent=5 // pred_check_branch
      %1912 = sbr.rel (%p1910) target = $region80
    $region79: #{tpu_custom_call.1} parent=5 // pred_region
      %s1913 = ssub.s32 %s19, 2
      // Predicated region
      $region81: #{tpu_custom_call.1} parent=79 // pred_check
        %p1914 = pneg %p346
      $region82: #{tpu_custom_call.1} parent=79 // pred_check_branch
        %1916 = sbr.rel (%p1914) target = $region84
      $region83: #{tpu_custom_call.1} parent=79 // pred_region
        %p1917 = scmp.lt.s32.totalorder %s25, 7
        %s1918 = scalar_select %p1917, %s25, 7
        %s1919 = smul.addr %s1918, 8
        %s1920 = scalar_lea.vmem %s13, %s1919
      $region84: #{tpu_custom_call.1} parent=79 // pred_fallthru
        _
    $region80: #{tpu_custom_call.1} parent=5 // pred_fallthru
      _
  $region6: #{tpu_custom_call.1} parent=0 // loop_footer
    %s23 = sadd.s32 1, %s19
  $region7: #{tpu_custom_call.1} parent=0 // loop_footer_branch
    %18 = sbr.rel target = $region3
  $region8: #{tpu_custom_call.1} parent=0 // loop_exit
    _

</llo_original>
